<compile_context>
chip_gen: v7x
topology: tpu7x:2x2x1
jax: 0.10.0
libtpu: 0.0.40
codegen_flags: <defaults>
</compile_context>

<pallas_src>
import functools
import math

import jax
import jax.numpy as jnp
from jax.experimental import pallas as pl
from jax.experimental.pallas import tpu as pltpu

LANE = 128          # lane width: output/hidden-dim padding granularity
SUBLANE_BF16 = 16   # bf16 sublane packing: batch-tile granularity


def _round_up(n, m):
    return ((n + m - 1) // m) * m


@functools.lru_cache(maxsize=None)
def _vmem_limit_bytes():
    """Per-generation scoped-VMEM request: ~3/4 of physical, capped at 64 MiB.
    v5e/v6e (128 MiB physical) -> 64 MiB; v7x (64 MiB physical) -> 48 MiB."""
    try:
        cap = int(pltpu.get_tpu_info().vmem_capacity_bytes)
    except Exception:
        cap = 64 * 1024 * 1024          # conservative fallback -> 48 MiB
    return min(64 * 1024 * 1024, (cap * 3) // 4)


def _pick_tm(batch, k0, nout_p, resident_weight_bytes, vmem_budget):
    """Batch tile: big enough to amortize ~0.35us/step grid overhead and fill
    the MXU M dim, small enough to (a) keep >=2 grid steps for v7x megacore
    sharding and (b) fit double-buffered f32 in/out tiles in the VMEM budget."""
    cap = 512                                            # sweepable 256-512
    tm = min(cap, _round_up(max(1, (batch + 1) // 2), SUBLANE_BF16))
    per_row = 2 * 4 * (k0 + nout_p)                      # 2x-buffered f32 in + out
    avail = max(vmem_budget - resident_weight_bytes - (8 << 20), 4 << 20)
    tm_fit = max(SUBLANE_BF16, (avail // per_row) // SUBLANE_BF16 * SUBLANE_BF16)
    return max(SUBLANE_BF16, min(tm, tm_fit))


# ---------------------------------------------------------------------------
# Fused kernel: refs = (x, w0, b0, w1, b1, ..., w_out, b_out, out)
# ---------------------------------------------------------------------------
def _make_fused_kernel(num_hidden, n_classes):
    def kernel(*refs):
        x_ref = refs[0]
        o_ref = refs[-1]
        params = refs[1:-1]

        h = x_ref[...].astype(jnp.bfloat16)            # f32 HBM stream, cast on-chip
        for li in range(num_hidden):
            w = params[2 * li][...]                    # bf16 (K, Np)
            b = params[2 * li + 1][...]                # f32  (1, Np)
            z = jnp.dot(h, w, preferred_element_type=jnp.float32) + b
            h = jnp.maximum(z, 0.0).astype(jnp.bfloat16)   # padded cols stay exactly 0
            # TODO(synk): training-mode dropout (pltpu.prng_random_bits mask) not
            # emitted; forward matches eval() semantics.

        w = params[-2][...]
        b = params[-1][...]
        z = jnp.dot(h, w, preferred_element_type=jnp.float32) + b

        # Mask padded logit lanes so they do not perturb max / logsumexp.
        col = jax.lax.broadcasted_iota(jnp.int32, z.shape, 1)
        z = jnp.where(col < n_classes, z, -jnp.inf)

        m = jnp.max(z, axis=-1, keepdims=True)
        lse = m + jnp.log(jnp.sum(jnp.exp(z - m), axis=-1, keepdims=True))
        o_ref[...] = z - lse                           # padded lanes = -inf (sliced off)

    return kernel


def _fused_forward(x_pad, flat_params, num_hidden, n_classes, tm,
                   single_buffer_weights=True):
    bp, k0 = x_pad.shape
    nout_p = flat_params[-1].shape[-1]
    nb = bp // tm

    kernel = _make_fused_kernel(num_hidden, n_classes)

    def _const_map(i):
        return (0, 0)

    in_specs = [pl.BlockSpec((tm, k0), lambda i: (i, 0))]   # batch-tiled f32 input
    for p in flat_params:
        if single_buffer_weights:
            # Constant index_map -> never re-fetched; single buffer halves the
            # resident-weight VMEM footprint.
            in_specs.append(pl.BlockSpec(p.shape, _const_map,
                                         pipeline_mode=pl.Buffered(1)))
        else:
            in_specs.append(pl.BlockSpec(p.shape, _const_map))

    return pl.pallas_call(
        kernel,
        out_shape=jax.ShapeDtypeStruct((bp, nout_p), jnp.float32),
        grid_spec=pltpu.PrefetchScalarGridSpec(
            num_scalar_prefetch=0,
            grid=(nb,),
            in_specs=in_specs,
            out_specs=pl.BlockSpec((tm, nout_p), lambda i: (i, 0)),
        ),
        compiler_params=pltpu.CompilerParams(
            dimension_semantics=("parallel",),          # batch axis -> megacore sharding
            vmem_limit_bytes=_vmem_limit_bytes(),       # per-generation budget
        ),
    )(x_pad, *flat_params)


# ---------------------------------------------------------------------------
# Classifier (feed-forward MLP) — parameters initialized deterministically
# ---------------------------------------------------------------------------
class Classifier:
    def __init__(self, input_size, output_size, hidden_layers, dropout=0.2,
                 key=jax.random.PRNGKey(42)):
        in_sizes = [input_size] if isinstance(input_size, int) else list(input_size)
        dims = in_sizes + list(hidden_layers)
        self.output_size = int(output_size)
        self.dropout = dropout
        # TODO(synk): for very large input_size / hidden widths (resident bf16
        # weights approaching ~40 MiB) add a K-dim reduction grid axis or
        # layer-wise weight streaming before this design hits v7x's 64 MiB VMEM.

        n_linear = (len(dims) - 1) + 1
        keys = jax.random.split(key, 2 * n_linear)

        def init_linear(kw, kb, fan_in, fan_out, pad_k):
            # PyTorch nn.Linear default: U(-1/sqrt(fan_in), 1/sqrt(fan_in))
            bound = 1.0 / math.sqrt(fan_in)
            w = jax.random.uniform(kw, (fan_in, fan_out), jnp.float32, -bound, bound)
            b = jax.random.uniform(kb, (1, fan_out), jnp.float32, -bound, bound)
            fi_p = _round_up(fan_in, LANE) if pad_k else fan_in
            fo_p = _round_up(fan_out, LANE)
            w_p = jnp.zeros((fi_p, fo_p), jnp.float32).at[:fan_in, :fan_out].set(w)
            b_p = jnp.zeros((1, fo_p), jnp.float32).at[:, :fan_out].set(b)
            return w_p.astype(jnp.bfloat16), b_p        # bf16 weights, f32 bias

        params = []
        for i, (fi, fo) in enumerate(zip(dims[:-1], dims[1:])):
            # Layer 0 keeps raw K (block == full dims), so x never needs a K pad.
            params.append(init_linear(keys[2 * i], keys[2 * i + 1], fi, fo, pad_k=(i > 0)))
        params.append(init_linear(keys[-2], keys[-1], dims[-1], output_size, pad_k=True))

        self.num_hidden = len(params) - 1
        self.flat_params = [t for wb in params for t in wb]
        self.in_features = dims[0]
        self.weight_bytes = sum(int(p.size) * p.dtype.itemsize for p in self.flat_params)

    def __call__(self, x):
        # Flatten (N, C, H, W) -> (N, C*H*W) row-major, same as torch .view
        batch = x.shape[0]
        x2 = x.reshape(batch, -1).astype(jnp.float32)
        if x2.shape[1] != self.in_features:
            raise ValueError(f"expected {self.in_features} features, got {x2.shape[1]}")

        nout_p = self.flat_params[-1].shape[-1]
        tm = _pick_tm(batch, x2.shape[1], nout_p, self.weight_bytes, _vmem_limit_bytes())

        bp = _round_up(batch, tm)
        if bp != batch:
            # Pad only the batch dim (zero rows; computed then sliced off).
            # TODO(synk): masked short last tile (pl.cdiv grid) would avoid this
            # copy for large batches that are not a multiple of tm.
            x2 = jnp.pad(x2, ((0, bp - batch), (0, 0)))

        try:
            out_p = _fused_forward(x2, self.flat_params, self.num_hidden,
                                   self.output_size, tm, single_buffer_weights=True)
        except Exception:
            # Older jax without BlockSpec pipeline_mode support: default buffering.
            out_p = _fused_forward(x2, self.flat_params, self.num_hidden,
                                   self.output_size, tm, single_buffer_weights=False)
        return out_p[:batch, :self.output_size]


if __name__ == "__main__":
    key = jax.random.PRNGKey(0)
    x = jax.random.normal(key, (2, 4, 16, 16), dtype=jnp.float32)  # NCHW

    model = Classifier(input_size=4 * 16 * 16,
                       output_size=10,
                       hidden_layers=[128, 32],
                       dropout=0.2)

    out = jax.block_until_ready(model(x))

    assert out.shape == (2, 10)
    # log_softmax rows sum (in prob space) to ~1
    assert jnp.allclose(jnp.sum(jnp.exp(out), axis=1), 1.0, atol=1e-4)

    # Reference forward with the same bf16 params via plain XLA.
    def ref_forward(xr):
        cur = xr.reshape(xr.shape[0], -1).astype(jnp.bfloat16)
        fp = model.flat_params
        for li in range(model.num_hidden):
            z = jnp.dot(cur, fp[2 * li], preferred_element_type=jnp.float32) + fp[2 * li + 1]
            cur = jnp.maximum(z, 0.0).astype(jnp.bfloat16)
        z = jnp.dot(cur, fp[-2], preferred_element_type=jnp.float32) + fp[-1]
        z = z[:, :model.output_size]
        return jax.nn.log_softmax(z, axis=-1)

    ref = jax.block_until_ready(ref_forward(x))
    assert jnp.allclose(out, ref, atol=2e-2, rtol=2e-2)

    print("KERNEL_OK")
</pallas_src>

<mosaic_0001>
module attributes {stable_mosaic.version = 11 : i64} {
  func.func @kernel(%arg0: i32, %arg1: memref<16x1024xf32, #tpu.memory_space<vmem>>, %arg2: memref<1024x128xbf16, #tpu.memory_space<vmem>>, %arg3: memref<1x128xf32, #tpu.memory_space<vmem>>, %arg4: memref<128x128xbf16, #tpu.memory_space<vmem>>, %arg5: memref<1x128xf32, #tpu.memory_space<vmem>>, %arg6: memref<128x128xbf16, #tpu.memory_space<vmem>>, %arg7: memref<1x128xf32, #tpu.memory_space<vmem>>, %arg8: memref<16x128xf32, #tpu.memory_space<vmem>>) attributes {dimension_semantics = [#tpu.dimension_semantics<parallel>], iteration_bounds = array<i64: 1>, scalar_prefetch = 0 : i64, scratch_operands = 0 : i64, tpu.core_type = #tpu.core_type<tc>, window_params = [{transform_indices = @transform_0, window_bounds = array<i64: 16, 1024>}, {pipeline_mode = #tpu.pipeline_mode<synchronous>, transform_indices = @transform_1, window_bounds = array<i64: 1024, 128>}, {pipeline_mode = #tpu.pipeline_mode<synchronous>, transform_indices = @transform_2, window_bounds = array<i64: 1, 128>}, {pipeline_mode = #tpu.pipeline_mode<synchronous>, transform_indices = @transform_3, window_bounds = array<i64: 128, 128>}, {pipeline_mode = #tpu.pipeline_mode<synchronous>, transform_indices = @transform_4, window_bounds = array<i64: 1, 128>}, {pipeline_mode = #tpu.pipeline_mode<synchronous>, transform_indices = @transform_5, window_bounds = array<i64: 128, 128>}, {pipeline_mode = #tpu.pipeline_mode<synchronous>, transform_indices = @transform_6, window_bounds = array<i64: 1, 128>}, {transform_indices = @transform_7, window_bounds = array<i64: 16, 128>}]} {
    %c0 = arith.constant 0 : index
    %c0_0 = arith.constant 0 : index
    %0 = vector.load %arg1[%c0, %c0_0] : memref<16x1024xf32, #tpu.memory_space<vmem>>, vector<16x1024xf32>
    %1 = arith.truncf %0 : vector<16x1024xf32> to vector<16x1024xbf16>
    %c0_1 = arith.constant 0 : index
    %c0_2 = arith.constant 0 : index
    %2 = vector.load %arg2[%c0_1, %c0_2] : memref<1024x128xbf16, #tpu.memory_space<vmem>>, vector<1024x128xbf16>
    %c0_3 = arith.constant 0 : index
    %c0_4 = arith.constant 0 : index
    %3 = vector.load %arg3[%c0_3, %c0_4] : memref<1x128xf32, #tpu.memory_space<vmem>>, vector<1x128xf32>
    %cst = arith.constant dense<0.000000e+00> : vector<16x128xf32>
    %4 = tpu.matmul %1, %2, %cst {dimension_numbers = #tpu.dot_dimension_numbers<[1], [0], [0], [1], [0, 0, 1, 1], [], []>} : vector<16x1024xbf16>, vector<1024x128xbf16>, vector<16x128xf32> -> vector<16x128xf32>
    %5 = vector.broadcast %3 : vector<1x128xf32> to vector<16x128xf32>
    %6 = arith.addf %4, %5 : vector<16x128xf32>
    %cst_5 = arith.constant 0.000000e+00 : f32
    %7 = vector.broadcast %cst_5 : f32 to vector<16x128xf32>
    %8 = arith.maximumf %6, %7 : vector<16x128xf32>
    %9 = arith.truncf %8 : vector<16x128xf32> to vector<16x128xbf16>
    %c0_6 = arith.constant 0 : index
    %c0_7 = arith.constant 0 : index
    %10 = vector.load %arg4[%c0_6, %c0_7] : memref<128x128xbf16, #tpu.memory_space<vmem>>, vector<128x128xbf16>
    %c0_8 = arith.constant 0 : index
    %c0_9 = arith.constant 0 : index
    %11 = vector.load %arg5[%c0_8, %c0_9] : memref<1x128xf32, #tpu.memory_space<vmem>>, vector<1x128xf32>
    %cst_10 = arith.constant dense<0.000000e+00> : vector<16x128xf32>
    %12 = tpu.matmul %9, %10, %cst_10 {dimension_numbers = #tpu.dot_dimension_numbers<[1], [0], [0], [1], [0, 0, 1, 1], [], []>} : vector<16x128xbf16>, vector<128x128xbf16>, vector<16x128xf32> -> vector<16x128xf32>
    %13 = vector.broadcast %11 : vector<1x128xf32> to vector<16x128xf32>
    %14 = arith.addf %12, %13 : vector<16x128xf32>
    %cst_11 = arith.constant 0.000000e+00 : f32
    %15 = vector.broadcast %cst_11 : f32 to vector<16x128xf32>
    %16 = arith.maximumf %14, %15 : vector<16x128xf32>
    %17 = arith.truncf %16 : vector<16x128xf32> to vector<16x128xbf16>
    %c0_12 = arith.constant 0 : index
    %c0_13 = arith.constant 0 : index
    %18 = vector.load %arg6[%c0_12, %c0_13] : memref<128x128xbf16, #tpu.memory_space<vmem>>, vector<128x128xbf16>
    %c0_14 = arith.constant 0 : index
    %c0_15 = arith.constant 0 : index
    %19 = vector.load %arg7[%c0_14, %c0_15] : memref<1x128xf32, #tpu.memory_space<vmem>>, vector<1x128xf32>
    %cst_16 = arith.constant dense<0.000000e+00> : vector<16x128xf32>
    %20 = tpu.matmul %17, %18, %cst_16 {dimension_numbers = #tpu.dot_dimension_numbers<[1], [0], [0], [1], [0, 0, 1, 1], [], []>} : vector<16x128xbf16>, vector<128x128xbf16>, vector<16x128xf32> -> vector<16x128xf32>
    %21 = vector.broadcast %19 : vector<1x128xf32> to vector<16x128xf32>
    %22 = arith.addf %20, %21 : vector<16x128xf32>
    %23 = tpu.iota {dimensions = array<i32: 1>} : vector<16x128xi32>
    %c10_i32 = arith.constant 10 : i32
    %24 = vector.broadcast %c10_i32 : i32 to vector<16x128xi32>
    %25 = arith.cmpi slt, %23, %24 : vector<16x128xi32>
    %cst_17 = arith.constant 0xFF800000 : f32
    %26 = vector.broadcast %cst_17 : f32 to vector<16x128xf32>
    %27 = arith.select %25, %22, %26 : vector<16x128xi1>, vector<16x128xf32>
    %cst_18 = arith.constant dense<0xFF800000> : vector<16xf32>
    %28 = vector.multi_reduction <maximumf>, %27, %cst_18 [1] : vector<16x128xf32> to vector<16xf32>
    %29 = vector.shape_cast %28 : vector<16xf32> to vector<16x1xf32>
    %30 = vector.broadcast %29 : vector<16x1xf32> to vector<16x128xf32>
    %31 = arith.subf %27, %30 : vector<16x128xf32>
    %32 = math.exp %31 : vector<16x128xf32>
    %cst_19 = arith.constant dense<0.000000e+00> : vector<16xf32>
    %33 = vector.multi_reduction <add>, %32, %cst_19 [1] : vector<16x128xf32> to vector<16xf32>
    %34 = vector.shape_cast %33 : vector<16xf32> to vector<16x1xf32>
    %35 = math.log %34 : vector<16x1xf32>
    %36 = arith.addf %29, %35 : vector<16x1xf32>
    %37 = vector.broadcast %36 : vector<16x1xf32> to vector<16x128xf32>
    %38 = arith.subf %27, %37 : vector<16x128xf32>
    %c0_20 = arith.constant 0 : index
    %c0_21 = arith.constant 0 : index
    %39 = vector.load %arg8[%c0_20, %c0_21] : memref<16x128xf32, #tpu.memory_space<vmem>>, vector<16x128xf32>
    tpu.vector_store %arg8[%c0_20, %c0_21], %38 {strides = array<i32>} : memref<16x128xf32, #tpu.memory_space<vmem>>, vector<16x128xf32>,
    return
  }
  func.func @transform_0(%arg0: i32) -> (i32, i32) {
    %c0_i32 = arith.constant 0 : i32
    %c0_i32_0 = arith.constant 0 : i32
    return %arg0, %c0_i32 : i32, i32
  }
  func.func @transform_1(%arg0: i32) -> (i32, i32) {
    %c0_i32 = arith.constant 0 : i32
    %c0_i32_0 = arith.constant 0 : i32
    %c0_i32_1 = arith.constant 0 : i32
    return %c0_i32, %c0_i32_0 : i32, i32
  }
  func.func @transform_2(%arg0: i32) -> (i32, i32) {
    %c0_i32 = arith.constant 0 : i32
    %c0_i32_0 = arith.constant 0 : i32
    %c0_i32_1 = arith.constant 0 : i32
    return %c0_i32, %c0_i32_0 : i32, i32
  }
  func.func @transform_3(%arg0: i32) -> (i32, i32) {
    %c0_i32 = arith.constant 0 : i32
    %c0_i32_0 = arith.constant 0 : i32
    %c0_i32_1 = arith.constant 0 : i32
    return %c0_i32, %c0_i32_0 : i32, i32
  }
  func.func @transform_4(%arg0: i32) -> (i32, i32) {
    %c0_i32 = arith.constant 0 : i32
    %c0_i32_0 = arith.constant 0 : i32
    %c0_i32_1 = arith.constant 0 : i32
    return %c0_i32, %c0_i32_0 : i32, i32
  }
  func.func @transform_5(%arg0: i32) -> (i32, i32) {
    %c0_i32 = arith.constant 0 : i32
    %c0_i32_0 = arith.constant 0 : i32
    %c0_i32_1 = arith.constant 0 : i32
    return %c0_i32, %c0_i32_0 : i32, i32
  }
  func.func @transform_6(%arg0: i32) -> (i32, i32) {
    %c0_i32 = arith.constant 0 : i32
    %c0_i32_0 = arith.constant 0 : i32
    %c0_i32_1 = arith.constant 0 : i32
    return %c0_i32, %c0_i32_0 : i32, i32
  }
  func.func @transform_7(%arg0: i32) -> (i32, i32) {
    %c0_i32 = arith.constant 0 : i32
    %c0_i32_0 = arith.constant 0 : i32
    return %arg0, %c0_i32 : i32, i32
  }
}

module attributes {stable_mosaic.version = 11 : i64} {
  func.func @kernel(%arg0: i32, %arg1: memref<16x1024xf32, #tpu.memory_space<vmem>>, %arg2: memref<1024x128xbf16, #tpu.memory_space<vmem>>, %arg3: memref<1x128xf32, #tpu.memory_space<vmem>>, %arg4: memref<128x128xbf16, #tpu.memory_space<vmem>>, %arg5: memref<1x128xf32, #tpu.memory_space<vmem>>, %arg6: memref<128x128xbf16, #tpu.memory_space<vmem>>, %arg7: memref<1x128xf32, #tpu.memory_space<vmem>>, %arg8: memref<16x128xf32, #tpu.memory_space<vmem>>) attributes {dimension_semantics = [#tpu.dimension_semantics<parallel>], iteration_bounds = array<i64: 1>, scalar_prefetch = 0 : i64, scratch_operands = 0 : i64, tpu.core_type = #tpu.core_type<tc>, window_params = [{transform_indices = @transform_0, window_bounds = array<i64: 16, 1024>}, {pipeline_mode = #tpu.pipeline_mode<synchronous>, transform_indices = @transform_1, window_bounds = array<i64: 1024, 128>}, {pipeline_mode = #tpu.pipeline_mode<synchronous>, transform_indices = @transform_2, window_bounds = array<i64: 1, 128>}, {pipeline_mode = #tpu.pipeline_mode<synchronous>, transform_indices = @transform_3, window_bounds = array<i64: 128, 128>}, {pipeline_mode = #tpu.pipeline_mode<synchronous>, transform_indices = @transform_4, window_bounds = array<i64: 1, 128>}, {pipeline_mode = #tpu.pipeline_mode<synchronous>, transform_indices = @transform_5, window_bounds = array<i64: 128, 128>}, {pipeline_mode = #tpu.pipeline_mode<synchronous>, transform_indices = @transform_6, window_bounds = array<i64: 1, 128>}, {transform_indices = @transform_7, window_bounds = array<i64: 16, 128>}]} {
    %c0 = arith.constant 0 : index
    %c0_0 = arith.constant 0 : index
    %0 = vector.load %arg1[%c0, %c0_0] : memref<16x1024xf32, #tpu.memory_space<vmem>>, vector<16x1024xf32>
    %1 = arith.truncf %0 : vector<16x1024xf32> to vector<16x1024xbf16>
    %c0_1 = arith.constant 0 : index
    %c0_2 = arith.constant 0 : index
    %2 = vector.load %arg2[%c0_1, %c0_2] : memref<1024x128xbf16, #tpu.memory_space<vmem>>, vector<1024x128xbf16>
    %c0_3 = arith.constant 0 : index
    %c0_4 = arith.constant 0 : index
    %3 = vector.load %arg3[%c0_3, %c0_4] : memref<1x128xf32, #tpu.memory_space<vmem>>, vector<1x128xf32>
    %cst = arith.constant dense<0.000000e+00> : vector<16x128xf32>
    %4 = tpu.matmul %1, %2, %cst {dimension_numbers = #tpu.dot_dimension_numbers<[1], [0], [0], [1], [0, 0, 1, 1], [], []>} : vector<16x1024xbf16>, vector<1024x128xbf16>, vector<16x128xf32> -> vector<16x128xf32>
    %5 = vector.broadcast %3 : vector<1x128xf32> to vector<16x128xf32>
    %6 = arith.addf %4, %5 : vector<16x128xf32>
    %cst_5 = arith.constant 0.000000e+00 : f32
    %7 = vector.broadcast %cst_5 : f32 to vector<16x128xf32>
    %8 = arith.maximumf %6, %7 : vector<16x128xf32>
    %9 = arith.truncf %8 : vector<16x128xf32> to vector<16x128xbf16>
    %c0_6 = arith.constant 0 : index
    %c0_7 = arith.constant 0 : index
    %10 = vector.load %arg4[%c0_6, %c0_7] : memref<128x128xbf16, #tpu.memory_space<vmem>>, vector<128x128xbf16>
    %c0_8 = arith.constant 0 : index
    %c0_9 = arith.constant 0 : index
    %11 = vector.load %arg5[%c0_8, %c0_9] : memref<1x128xf32, #tpu.memory_space<vmem>>, vector<1x128xf32>
    %cst_10 = arith.constant dense<0.000000e+00> : vector<16x128xf32>
    %12 = tpu.matmul %9, %10, %cst_10 {dimension_numbers = #tpu.dot_dimension_numbers<[1], [0], [0], [1], [0, 0, 1, 1], [], []>} : vector<16x128xbf16>, vector<128x128xbf16>, vector<16x128xf32> -> vector<16x128xf32>
    %13 = vector.broadcast %11 : vector<1x128xf32> to vector<16x128xf32>
    %14 = arith.addf %12, %13 : vector<16x128xf32>
    %cst_11 = arith.constant 0.000000e+00 : f32
    %15 = vector.broadcast %cst_11 : f32 to vector<16x128xf32>
    %16 = arith.maximumf %14, %15 : vector<16x128xf32>
    %17 = arith.truncf %16 : vector<16x128xf32> to vector<16x128xbf16>
    %c0_12 = arith.constant 0 : index
    %c0_13 = arith.constant 0 : index
    %18 = vector.load %arg6[%c0_12, %c0_13] : memref<128x128xbf16, #tpu.memory_space<vmem>>, vector<128x128xbf16>
    %c0_14 = arith.constant 0 : index
    %c0_15 = arith.constant 0 : index
    %19 = vector.load %arg7[%c0_14, %c0_15] : memref<1x128xf32, #tpu.memory_space<vmem>>, vector<1x128xf32>
    %cst_16 = arith.constant dense<0.000000e+00> : vector<16x128xf32>
    %20 = tpu.matmul %17, %18, %cst_16 {dimension_numbers = #tpu.dot_dimension_numbers<[1], [0], [0], [1], [0, 0, 1, 1], [], []>} : vector<16x128xbf16>, vector<128x128xbf16>, vector<16x128xf32> -> vector<16x128xf32>
    %21 = vector.broadcast %19 : vector<1x128xf32> to vector<16x128xf32>
    %22 = arith.addf %20, %21 : vector<16x128xf32>
    %23 = tpu.iota {dimensions = array<i32: 1>} : vector<16x128xi32>
    %c10_i32 = arith.constant 10 : i32
    %24 = vector.broadcast %c10_i32 : i32 to vector<16x128xi32>
    %25 = arith.cmpi slt, %23, %24 : vector<16x128xi32>
    %cst_17 = arith.constant 0xFF800000 : f32
    %26 = vector.broadcast %cst_17 : f32 to vector<16x128xf32>
    %27 = arith.select %25, %22, %26 : vector<16x128xi1>, vector<16x128xf32>
    %cst_18 = arith.constant dense<0xFF800000> : vector<16xf32>
    %28 = vector.multi_reduction <maximumf>, %27, %cst_18 [1] : vector<16x128xf32> to vector<16xf32>
    %29 = vector.shape_cast %28 : vector<16xf32> to vector<16x1xf32>
    %30 = vector.broadcast %29 : vector<16x1xf32> to vector<16x128xf32>
    %31 = arith.subf %27, %30 : vector<16x128xf32>
    %32 = math.exp %31 : vector<16x128xf32>
    %cst_19 = arith.constant dense<0.000000e+00> : vector<16xf32>
    %33 = vector.multi_reduction <add>, %32, %cst_19 [1] : vector<16x128xf32> to vector<16xf32>
    %34 = vector.shape_cast %33 : vector<16xf32> to vector<16x1xf32>
    %35 = math.log %34 : vector<16x1xf32>
    %36 = arith.addf %29, %35 : vector<16x1xf32>
    %37 = vector.broadcast %36 : vector<16x1xf32> to vector<16x128xf32>
    %38 = arith.subf %27, %37 : vector<16x128xf32>
    %c0_20 = arith.constant 0 : index
    %c0_21 = arith.constant 0 : index
    %39 = vector.load %arg8[%c0_20, %c0_21] : memref<16x128xf32, #tpu.memory_space<vmem>>, vector<16x128xf32>
    tpu.vector_store %arg8[%c0_20, %c0_21], %38 {strides = array<i32>} : memref<16x128xf32, #tpu.memory_space<vmem>>, vector<16x128xf32>,
    return
  }
  func.func @transform_0(%arg0: i32) -> (i32, i32) {
    %c0_i32 = arith.constant 0 : i32
    %c0_i32_0 = arith.constant 0 : i32
    return %arg0, %c0_i32 : i32, i32
  }
  func.func @transform_1(%arg0: i32) -> (i32, i32) {
    %c0_i32 = arith.constant 0 : i32
    %c0_i32_0 = arith.constant 0 : i32
    %c0_i32_1 = arith.constant 0 : i32
    return %c0_i32, %c0_i32_0 : i32, i32
  }
  func.func @transform_2(%arg0: i32) -> (i32, i32) {
    %c0_i32 = arith.constant 0 : i32
    %c0_i32_0 = arith.constant 0 : i32
    %c0_i32_1 = arith.constant 0 : i32
    return %c0_i32, %c0_i32_0 : i32, i32
  }
  func.func @transform_3(%arg0: i32) -> (i32, i32) {
    %c0_i32 = arith.constant 0 : i32
    %c0_i32_0 = arith.constant 0 : i32
    %c0_i32_1 = arith.constant 0 : i32
    return %c0_i32, %c0_i32_0 : i32, i32
  }
  func.func @transform_4(%arg0: i32) -> (i32, i32) {
    %c0_i32 = arith.constant 0 : i32
    %c0_i32_0 = arith.constant 0 : i32
    %c0_i32_1 = arith.constant 0 : i32
    return %c0_i32, %c0_i32_0 : i32, i32
  }
  func.func @transform_5(%arg0: i32) -> (i32, i32) {
    %c0_i32 = arith.constant 0 : i32
    %c0_i32_0 = arith.constant 0 : i32
    %c0_i32_1 = arith.constant 0 : i32
    return %c0_i32, %c0_i32_0 : i32, i32
  }
  func.func @transform_6(%arg0: i32) -> (i32, i32) {
    %c0_i32 = arith.constant 0 : i32
    %c0_i32_0 = arith.constant 0 : i32
    %c0_i32_1 = arith.constant 0 : i32
    return %c0_i32, %c0_i32_0 : i32, i32
  }
  func.func @transform_7(%arg0: i32) -> (i32, i32) {
    %c0_i32 = arith.constant 0 : i32
    %c0_i32_0 = arith.constant 0 : i32
    return %arg0, %c0_i32 : i32, i32
  }
}

</mosaic_0001>

<llo_original>
// kernel: tpu_custom_call.1
$region0: #{tpu_custom_call.1}
  #allocation0 [shape = 'u32[]', space=smem, size = 0x4, offset = 0x4, fixed_abs, tag = 'smem constant byte address 0x4 - core index']
  #allocation1 [shape = 'u32[144,128]{1,0:T(1,128)}', space=vmem, size = 0x12000, scoped, tag = 'internal scratch']
  %s0 = inlined_call_operand.hbm [shape: f32[16,1024], index: 0, kind: input, shape index: {}]
  %s1 = inlined_call_operand.hbm [shape: bf16[1024,128], index: 1, kind: input, shape index: {}]
  %s2 = inlined_call_operand.vmem [shape: f32[1,128], index: 2, kind: input, shape index: {}]
  %s3 = inlined_call_operand.hbm [shape: bf16[128,128], index: 3, kind: input, shape index: {}]
  %s4 = inlined_call_operand.vmem [shape: f32[1,128], index: 4, kind: input, shape index: {}]
  %s5 = inlined_call_operand.hbm [shape: bf16[128,128], index: 5, kind: input, shape index: {}]
  %s6 = inlined_call_operand.vmem [shape: f32[1,128], index: 6, kind: input, shape index: {}]
  %s7 = inlined_call_operand.hbm [shape: f32[16,128], index: 7, kind: output, shape index: {}]
  %s8 = sld [smem:[#allocation0]]
  $region54: #{tpu_custom_call.1} parent=0
    _
  %s10 = ssub.s32 1, %s8
  %s11 = scalar_select 0, %s10, %s8
  $region1: #{tpu_custom_call.1} parent=0
    #allocation2 [shape = 'u8[65536]{0}', space=vmem, size = 0x10000, scoped, tag = 'input window, operand 0, single buffered']
    #allocation3 [shape = 's32[1]{0}', space=sflag, size = 0x4, scoped, tag = 'scoped memory for tpu_custom_call.1']
    #allocation4 [shape = 's32[1]{0}', space=sflag, size = 0x4, scoped, tag = 'scoped memory for tpu_custom_call.1']
    #allocation5 [shape = 'u8[262144]{0}', space=vmem, size = 0x40000, scoped, tag = 'input window, operand 1, single buffered']
    #allocation6 [shape = 's32[1]{0}', space=sflag, size = 0x4, scoped, tag = 'scoped memory for tpu_custom_call.1']
    #allocation7 [shape = 'u8[32768]{0}', space=vmem, size = 0x8000, scoped, tag = 'input window, operand 3, single buffered']
    #allocation8 [shape = 'u8[32768]{0}', space=vmem, size = 0x8000, scoped, tag = 'input window, operand 5, single buffered']
    #allocation9 [shape = 's32[1]{0}', space=sflag, size = 0x4, scoped, tag = 'scoped memory for tpu_custom_call.1']
    #allocation10 [shape = 'u8[8192]{0}', space=vmem, size = 0x2000, scoped, tag = 'output window, operand 0, single buffered']
    %12 = vsyncpa [#allocation3], 0
    %13 = vsyncpa [#allocation6], 0
    %14 = vsyncpa [#allocation9], 0
    %15 = vsyncpa [#allocation4], 0
    // Predicated region
    $region2: #{tpu_custom_call.1} parent=1 // pred_check
      _
    $region3: #{tpu_custom_call.1} parent=1 // pred_check_branch
      %17 = sbr.rel (0) target = $region5
    $region4: #{tpu_custom_call.1} parent=1 // pred_region
      %s19 = ssub.s32 2048, 2048
      %20 = vsyncadd [#allocation3], %s19
      %s21 = sshll.u32 [#allocation2], 4
      %s22 = int_to_ptr.vmem [resolvable:$true] %s21
      %27 = dma.hbm_to_vmem [thread:$0]  %s0, 2048, %s22, [#allocation3], 1024, 1024, 64
    $region5: #{tpu_custom_call.1} parent=1 // pred_fallthru
      _
    // Predicated region
    $region6: #{tpu_custom_call.1} parent=1 // pred_check
      _
    $region7: #{tpu_custom_call.1} parent=1 // pred_check_branch
      %29 = sbr.rel (0) target = $region9
    $region8: #{tpu_custom_call.1} parent=1 // pred_region
      %s31 = ssub.s32 8192, 8192
      %32 = vsyncadd [#allocation6], %s31
      %s33 = sshll.u32 [#allocation5], 4
      %s34 = int_to_ptr.vmem [resolvable:$true] %s33
      %39 = dma.hbm_to_vmem [thread:$0]  %s1, 8192, %s34, [#allocation6], 64, 64, 4
    $region9: #{tpu_custom_call.1} parent=1 // pred_fallthru
      _
    // Predicated region
    $region10: #{tpu_custom_call.1} parent=1 // pred_check
      _
    $region11: #{tpu_custom_call.1} parent=1 // pred_check_branch
      %41 = sbr.rel (0) target = $region13
    $region12: #{tpu_custom_call.1} parent=1 // pred_region
      _
    $region13: #{tpu_custom_call.1} parent=1 // pred_fallthru
      _
    // Predicated region
    $region14: #{tpu_custom_call.1} parent=1 // pred_check
      _
    $region15: #{tpu_custom_call.1} parent=1 // pred_check_branch
      %43 = sbr.rel (0) target = $region17
    $region16: #{tpu_custom_call.1} parent=1 // pred_region
      %s45 = ssub.s32 1024, 1024
      %46 = vsyncadd [#allocation6], %s45
      %s47 = sshll.u32 [#allocation7], 4
      %s48 = int_to_ptr.vmem [resolvable:$true] %s47
      %53 = dma.hbm_to_vmem [thread:$0]  %s3, 1024, %s48, [#allocation6], 64, 64, 4
    $region17: #{tpu_custom_call.1} parent=1 // pred_fallthru
      _
    // Predicated region
    $region18: #{tpu_custom_call.1} parent=1 // pred_check
      _
    $region19: #{tpu_custom_call.1} parent=1 // pred_check_branch
      %55 = sbr.rel (0) target = $region21
    $region20: #{tpu_custom_call.1} parent=1 // pred_region
      _
    $region21: #{tpu_custom_call.1} parent=1 // pred_fallthru
      _
    // Predicated region
    $region22: #{tpu_custom_call.1} parent=1 // pred_check
      _
    $region23: #{tpu_custom_call.1} parent=1 // pred_check_branch
      %57 = sbr.rel (0) target = $region25
    $region24: #{tpu_custom_call.1} parent=1 // pred_region
      %s59 = ssub.s32 1024, 1024
      %60 = vsyncadd [#allocation9], %s59
      %s61 = sshll.u32 [#allocation8], 4
      %s62 = int_to_ptr.vmem [resolvable:$true] %s61
      %67 = dma.hbm_to_vmem [thread:$0]  %s5, 1024, %s62, [#allocation9], 64, 64, 4
    $region25: #{tpu_custom_call.1} parent=1 // pred_fallthru
      _
    // Predicated region
    $region26: #{tpu_custom_call.1} parent=1 // pred_check
      _
    $region27: #{tpu_custom_call.1} parent=1 // pred_check_branch
      %69 = sbr.rel (0) target = $region29
    $region28: #{tpu_custom_call.1} parent=1 // pred_region
      _
    $region29: #{tpu_custom_call.1} parent=1 // pred_fallthru
      _
    // Predicated region
    $region30: #{tpu_custom_call.1} parent=1 // pred_check
      _
    $region31: #{tpu_custom_call.1} parent=1 // pred_check_branch
      %71 = sbr.rel (0) target = $region33
    $region32: #{tpu_custom_call.1} parent=1 // pred_region
      %72 = dma.done [#allocation3], 2048
    $region33: #{tpu_custom_call.1} parent=1 // pred_fallthru
      _
    // Predicated region
    $region34: #{tpu_custom_call.1} parent=1 // pred_check
      _
    $region35: #{tpu_custom_call.1} parent=1 // pred_check_branch
      %74 = sbr.rel (0) target = $region37
    $region36: #{tpu_custom_call.1} parent=1 // pred_region
      %75 = dma.done [#allocation6], 8192
    $region37: #{tpu_custom_call.1} parent=1 // pred_fallthru
      _
    // Predicated region
    $region38: #{tpu_custom_call.1} parent=1 // pred_check
      _
    $region39: #{tpu_custom_call.1} parent=1 // pred_check_branch
      %77 = sbr.rel (0) target = $region41
    $region40: #{tpu_custom_call.1} parent=1 // pred_region
      %78 = dma.done [#allocation6], 1024
    $region41: #{tpu_custom_call.1} parent=1 // pred_fallthru
      _
    // Predicated region
    $region42: #{tpu_custom_call.1} parent=1 // pred_check
      _
    $region43: #{tpu_custom_call.1} parent=1 // pred_check_branch
      %80 = sbr.rel (0) target = $region45
    $region44: #{tpu_custom_call.1} parent=1 // pred_region
      %81 = dma.done [#allocation9], 1024
    $region45: #{tpu_custom_call.1} parent=1 // pred_fallthru
      _
    %v83 = vld [vmem:[#allocation2] sm:$0xff]
    %v84 = vld [vmem:[#allocation2 + $0x8] sm:$0xff]
    %v85 = vld [vmem:[#allocation2 + $0x10] sm:$0xff]
    %v86 = vld [vmem:[#allocation2 + $0x18] sm:$0xff]
    %v87 = vld [vmem:[#allocation2 + $0x20] sm:$0xff]
    %v88 = vld [vmem:[#allocation2 + $0x28] sm:$0xff]
    %v89 = vld [vmem:[#allocation2 + $0x30] sm:$0xff]
    %v90 = vld [vmem:[#allocation2 + $0x38] sm:$0xff]
    %v91 = vld [vmem:[#allocation2 + $0x40] sm:$0xff]
    %v92 = vld [vmem:[#allocation2 + $0x48] sm:$0xff]
    %v93 = vld [vmem:[#allocation2 + $0x50] sm:$0xff]
    %v94 = vld [vmem:[#allocation2 + $0x58] sm:$0xff]
    %v95 = vld [vmem:[#allocation2 + $0x60] sm:$0xff]
    %v96 = vld [vmem:[#allocation2 + $0x68] sm:$0xff]
    %v97 = vld [vmem:[#allocation2 + $0x70] sm:$0xff]
    %v98 = vld [vmem:[#allocation2 + $0x78] sm:$0xff]
    %v99 = vpack.c.bf16 %v91, %v83
    %v100 = vpack.c.bf16 %v92, %v84
    %v101 = vpack.c.bf16 %v93, %v85
    %v102 = vpack.c.bf16 %v94, %v86
    %v103 = vpack.c.bf16 %v95, %v87
    %v104 = vpack.c.bf16 %v96, %v88
    %v105 = vpack.c.bf16 %v97, %v89
    %v106 = vpack.c.bf16 %v98, %v90
    %v107 = vld [vmem:[#allocation5] sm:$0xf]
    %v108 = vld [vmem:[#allocation5 + $0x4] sm:$0xf]
    %v109 = vld [vmem:[#allocation5 + $0x8] sm:$0xf]
    %v110 = vld [vmem:[#allocation5 + $0xc] sm:$0xf]
    %v111 = vld [vmem:[#allocation5 + $0x10] sm:$0xf]
    %v112 = vld [vmem:[#allocation5 + $0x14] sm:$0xf]
    %v113 = vld [vmem:[#allocation5 + $0x18] sm:$0xf]
    %v114 = vld [vmem:[#allocation5 + $0x1c] sm:$0xf]
    %v115 = vld [vmem:[#allocation5 + $0x20] sm:$0xf]
    %v116 = vld [vmem:[#allocation5 + $0x24] sm:$0xf]
    %v117 = vld [vmem:[#allocation5 + $0x28] sm:$0xf]
    %v118 = vld [vmem:[#allocation5 + $0x2c] sm:$0xf]
    %v119 = vld [vmem:[#allocation5 + $0x30] sm:$0xf]
    %v120 = vld [vmem:[#allocation5 + $0x34] sm:$0xf]
    %v121 = vld [vmem:[#allocation5 + $0x38] sm:$0xf]
    %v122 = vld [vmem:[#allocation5 + $0x3c] sm:$0xf]
    %v123 = vld [vmem:[#allocation5 + $0x40] sm:$0xf]
    %v124 = vld [vmem:[#allocation5 + $0x44] sm:$0xf]
    %v125 = vld [vmem:[#allocation5 + $0x48] sm:$0xf]
    %v126 = vld [vmem:[#allocation5 + $0x4c] sm:$0xf]
    %v127 = vld [vmem:[#allocation5 + $0x50] sm:$0xf]
    %v128 = vld [vmem:[#allocation5 + $0x54] sm:$0xf]
    %v129 = vld [vmem:[#allocation5 + $0x58] sm:$0xf]
    %v130 = vld [vmem:[#allocation5 + $0x5c] sm:$0xf]
    %v131 = vld [vmem:[#allocation5 + $0x60] sm:$0xf]
    %v132 = vld [vmem:[#allocation5 + $0x64] sm:$0xf]
    %v133 = vld [vmem:[#allocation5 + $0x68] sm:$0xf]
    %v134 = vld [vmem:[#allocation5 + $0x6c] sm:$0xf]
    %v135 = vld [vmem:[#allocation5 + $0x70] sm:$0xf]
    %v136 = vld [vmem:[#allocation5 + $0x74] sm:$0xf]
    %v137 = vld [vmem:[#allocation5 + $0x78] sm:$0xf]
    %v138 = vld [vmem:[#allocation5 + $0x7c] sm:$0xf]
    %v139 = vld [vmem:[#allocation5 + $0x80] sm:$0xf]
    %v140 = vld [vmem:[#allocation5 + $0x84] sm:$0xf]
    %v141 = vld [vmem:[#allocation5 + $0x88] sm:$0xf]
    %v142 = vld [vmem:[#allocation5 + $0x8c] sm:$0xf]
    %v143 = vld [vmem:[#allocation5 + $0x90] sm:$0xf]
    %v144 = vld [vmem:[#allocation5 + $0x94] sm:$0xf]
    %v145 = vld [vmem:[#allocation5 + $0x98] sm:$0xf]
    %v146 = vld [vmem:[#allocation5 + $0x9c] sm:$0xf]
    %v147 = vld [vmem:[#allocation5 + $0xa0] sm:$0xf]
    %v148 = vld [vmem:[#allocation5 + $0xa4] sm:$0xf]
    %v149 = vld [vmem:[#allocation5 + $0xa8] sm:$0xf]
    %v150 = vld [vmem:[#allocation5 + $0xac] sm:$0xf]
    %v151 = vld [vmem:[#allocation5 + $0xb0] sm:$0xf]
    %v152 = vld [vmem:[#allocation5 + $0xb4] sm:$0xf]
    %v153 = vld [vmem:[#allocation5 + $0xb8] sm:$0xf]
    %v154 = vld [vmem:[#allocation5 + $0xbc] sm:$0xf]
    %v155 = vld [vmem:[#allocation5 + $0xc0] sm:$0xf]
    %v156 = vld [vmem:[#allocation5 + $0xc4] sm:$0xf]
    %v157 = vld [vmem:[#allocation5 + $0xc8] sm:$0xf]
    %v158 = vld [vmem:[#allocation5 + $0xcc] sm:$0xf]
    %v159 = vld [vmem:[#allocation5 + $0xd0] sm:$0xf]
    %v160 = vld [vmem:[#allocation5 + $0xd4] sm:$0xf]
    %v161 = vld [vmem:[#allocation5 + $0xd8] sm:$0xf]
    %v162 = vld [vmem:[#allocation5 + $0xdc] sm:$0xf]
    %v163 = vld [vmem:[#allocation5 + $0xe0] sm:$0xf]
    %v164 = vld [vmem:[#allocation5 + $0xe4] sm:$0xf]
    %v165 = vld [vmem:[#allocation5 + $0xe8] sm:$0xf]
    %v166 = vld [vmem:[#allocation5 + $0xec] sm:$0xf]
    %v167 = vld [vmem:[#allocation5 + $0xf0] sm:$0xf]
    %v168 = vld [vmem:[#allocation5 + $0xf4] sm:$0xf]
    %v169 = vld [vmem:[#allocation5 + $0xf8] sm:$0xf]
    %v170 = vld [vmem:[#allocation5 + $0xfc] sm:$0xf]
    %v171 = vld [vmem:[#allocation5 + $0x100] sm:$0xf]
    %v172 = vld [vmem:[#allocation5 + $0x104] sm:$0xf]
    %v173 = vld [vmem:[#allocation5 + $0x108] sm:$0xf]
    %v174 = vld [vmem:[#allocation5 + $0x10c] sm:$0xf]
    %v175 = vld [vmem:[#allocation5 + $0x110] sm:$0xf]
    %v176 = vld [vmem:[#allocation5 + $0x114] sm:$0xf]
    %v177 = vld [vmem:[#allocation5 + $0x118] sm:$0xf]
    %v178 = vld [vmem:[#allocation5 + $0x11c] sm:$0xf]
    %v179 = vld [vmem:[#allocation5 + $0x120] sm:$0xf]
    %v180 = vld [vmem:[#allocation5 + $0x124] sm:$0xf]
    %v181 = vld [vmem:[#allocation5 + $0x128] sm:$0xf]
    %v182 = vld [vmem:[#allocation5 + $0x12c] sm:$0xf]
    %v183 = vld [vmem:[#allocation5 + $0x130] sm:$0xf]
    %v184 = vld [vmem:[#allocation5 + $0x134] sm:$0xf]
    %v185 = vld [vmem:[#allocation5 + $0x138] sm:$0xf]
    %v186 = vld [vmem:[#allocation5 + $0x13c] sm:$0xf]
    %v187 = vld [vmem:[#allocation5 + $0x140] sm:$0xf]
    %v188 = vld [vmem:[#allocation5 + $0x144] sm:$0xf]
    %v189 = vld [vmem:[#allocation5 + $0x148] sm:$0xf]
    %v190 = vld [vmem:[#allocation5 + $0x14c] sm:$0xf]
    %v191 = vld [vmem:[#allocation5 + $0x150] sm:$0xf]
    %v192 = vld [vmem:[#allocation5 + $0x154] sm:$0xf]
    %v193 = vld [vmem:[#allocation5 + $0x158] sm:$0xf]
    %v194 = vld [vmem:[#allocation5 + $0x15c] sm:$0xf]
    %v195 = vld [vmem:[#allocation5 + $0x160] sm:$0xf]
    %v196 = vld [vmem:[#allocation5 + $0x164] sm:$0xf]
    %v197 = vld [vmem:[#allocation5 + $0x168] sm:$0xf]
    %v198 = vld [vmem:[#allocation5 + $0x16c] sm:$0xf]
    %v199 = vld [vmem:[#allocation5 + $0x170] sm:$0xf]
    %v200 = vld [vmem:[#allocation5 + $0x174] sm:$0xf]
    %v201 = vld [vmem:[#allocation5 + $0x178] sm:$0xf]
    %v202 = vld [vmem:[#allocation5 + $0x17c] sm:$0xf]
    %v203 = vld [vmem:[#allocation5 + $0x180] sm:$0xf]
    %v204 = vld [vmem:[#allocation5 + $0x184] sm:$0xf]
    %v205 = vld [vmem:[#allocation5 + $0x188] sm:$0xf]
    %v206 = vld [vmem:[#allocation5 + $0x18c] sm:$0xf]
    %v207 = vld [vmem:[#allocation5 + $0x190] sm:$0xf]
    %v208 = vld [vmem:[#allocation5 + $0x194] sm:$0xf]
    %v209 = vld [vmem:[#allocation5 + $0x198] sm:$0xf]
    %v210 = vld [vmem:[#allocation5 + $0x19c] sm:$0xf]
    %v211 = vld [vmem:[#allocation5 + $0x1a0] sm:$0xf]
    %v212 = vld [vmem:[#allocation5 + $0x1a4] sm:$0xf]
    %v213 = vld [vmem:[#allocation5 + $0x1a8] sm:$0xf]
    %v214 = vld [vmem:[#allocation5 + $0x1ac] sm:$0xf]
    %v215 = vld [vmem:[#allocation5 + $0x1b0] sm:$0xf]
    %v216 = vld [vmem:[#allocation5 + $0x1b4] sm:$0xf]
    %v217 = vld [vmem:[#allocation5 + $0x1b8] sm:$0xf]
    %v218 = vld [vmem:[#allocation5 + $0x1bc] sm:$0xf]
    %v219 = vld [vmem:[#allocation5 + $0x1c0] sm:$0xf]
    %v220 = vld [vmem:[#allocation5 + $0x1c4] sm:$0xf]
    %v221 = vld [vmem:[#allocation5 + $0x1c8] sm:$0xf]
    %v222 = vld [vmem:[#allocation5 + $0x1cc] sm:$0xf]
    %v223 = vld [vmem:[#allocation5 + $0x1d0] sm:$0xf]
    %v224 = vld [vmem:[#allocation5 + $0x1d4] sm:$0xf]
    %v225 = vld [vmem:[#allocation5 + $0x1d8] sm:$0xf]
    %v226 = vld [vmem:[#allocation5 + $0x1dc] sm:$0xf]
    %v227 = vld [vmem:[#allocation5 + $0x1e0] sm:$0xf]
    %v228 = vld [vmem:[#allocation5 + $0x1e4] sm:$0xf]
    %v229 = vld [vmem:[#allocation5 + $0x1e8] sm:$0xf]
    %v230 = vld [vmem:[#allocation5 + $0x1ec] sm:$0xf]
    %v231 = vld [vmem:[#allocation5 + $0x1f0] sm:$0xf]
    %v232 = vld [vmem:[#allocation5 + $0x1f4] sm:$0xf]
    %v233 = vld [vmem:[#allocation5 + $0x1f8] sm:$0xf]
    %v234 = vld [vmem:[#allocation5 + $0x1fc] sm:$0xf]
    %v235 = vld [vmem:[%s2] sm:$0x1]
    %v237 = vlaneseq
    %v238 = vshrl.u32 %v237, 7
    %v239 = vsub.s32 0, %v238
    %v240 = vrot.slane %v235, %v239
    %v370 = vunpack.c.l.b16 %v107
    %v371 = vunpack.c.l.b16 %v108
    %v372 = vunpack.c.l.b16 %v109
    %v373 = vunpack.c.l.b16 %v110
    %v374 = vunpack.c.l.b16 %v111
    %v375 = vunpack.c.l.b16 %v112
    %v376 = vunpack.c.l.b16 %v113
    %v377 = vunpack.c.l.b16 %v114
    %v378 = vunpack.c.l.b16 %v115
    %v379 = vunpack.c.l.b16 %v116
    %v380 = vunpack.c.l.b16 %v117
    %v381 = vunpack.c.l.b16 %v118
    %v382 = vunpack.c.l.b16 %v119
    %v383 = vunpack.c.l.b16 %v120
    %v384 = vunpack.c.l.b16 %v121
    %v385 = vunpack.c.l.b16 %v122
    %v386 = vunpack.c.l.b16 %v123
    %v387 = vunpack.c.l.b16 %v124
    %v388 = vunpack.c.l.b16 %v125
    %v389 = vunpack.c.l.b16 %v126
    %v390 = vunpack.c.l.b16 %v127
    %v391 = vunpack.c.l.b16 %v128
    %v392 = vunpack.c.l.b16 %v129
    %v393 = vunpack.c.l.b16 %v130
    %v394 = vunpack.c.l.b16 %v131
    %v395 = vunpack.c.l.b16 %v132
    %v396 = vunpack.c.l.b16 %v133
    %v397 = vunpack.c.l.b16 %v134
    %v398 = vunpack.c.l.b16 %v135
    %v399 = vunpack.c.l.b16 %v136
    %v400 = vunpack.c.l.b16 %v137
    %v401 = vunpack.c.l.b16 %v138
    %v402 = vunpack.c.l.b16 %v139
    %v403 = vunpack.c.l.b16 %v140
    %v404 = vunpack.c.l.b16 %v141
    %v405 = vunpack.c.l.b16 %v142
    %v406 = vunpack.c.l.b16 %v143
    %v407 = vunpack.c.l.b16 %v144
    %v408 = vunpack.c.l.b16 %v145
    %v409 = vunpack.c.l.b16 %v146
    %v410 = vunpack.c.l.b16 %v147
    %v411 = vunpack.c.l.b16 %v148
    %v412 = vunpack.c.l.b16 %v149
    %v413 = vunpack.c.l.b16 %v150
    %v414 = vunpack.c.l.b16 %v151
    %v415 = vunpack.c.l.b16 %v152
    %v416 = vunpack.c.l.b16 %v153
    %v417 = vunpack.c.l.b16 %v154
    %v418 = vunpack.c.l.b16 %v155
    %v419 = vunpack.c.l.b16 %v156
    %v420 = vunpack.c.l.b16 %v157
    %v421 = vunpack.c.l.b16 %v158
    %v422 = vunpack.c.l.b16 %v159
    %v423 = vunpack.c.l.b16 %v160
    %v424 = vunpack.c.l.b16 %v161
    %v425 = vunpack.c.l.b16 %v162
    %v426 = vunpack.c.l.b16 %v163
    %v427 = vunpack.c.l.b16 %v164
    %v428 = vunpack.c.l.b16 %v165
    %v429 = vunpack.c.l.b16 %v166
    %v430 = vunpack.c.l.b16 %v167
    %v431 = vunpack.c.l.b16 %v168
    %v432 = vunpack.c.l.b16 %v169
    %v433 = vunpack.c.l.b16 %v170
    %v434 = vunpack.c.l.b16 %v171
    %v435 = vunpack.c.l.b16 %v172
    %v436 = vunpack.c.l.b16 %v173
    %v437 = vunpack.c.l.b16 %v174
    %v438 = vunpack.c.l.b16 %v175
    %v439 = vunpack.c.l.b16 %v176
    %v440 = vunpack.c.l.b16 %v177
    %v441 = vunpack.c.l.b16 %v178
    %v442 = vunpack.c.l.b16 %v179
    %v443 = vunpack.c.l.b16 %v180
    %v444 = vunpack.c.l.b16 %v181
    %v445 = vunpack.c.l.b16 %v182
    %v446 = vunpack.c.l.b16 %v183
    %v447 = vunpack.c.l.b16 %v184
    %v448 = vunpack.c.l.b16 %v185
    %v449 = vunpack.c.l.b16 %v186
    %v450 = vunpack.c.l.b16 %v187
    %v451 = vunpack.c.l.b16 %v188
    %v452 = vunpack.c.l.b16 %v189
    %v453 = vunpack.c.l.b16 %v190
    %v454 = vunpack.c.l.b16 %v191
    %v455 = vunpack.c.l.b16 %v192
    %v456 = vunpack.c.l.b16 %v193
    %v457 = vunpack.c.l.b16 %v194
    %v458 = vunpack.c.l.b16 %v195
    %v459 = vunpack.c.l.b16 %v196
    %v460 = vunpack.c.l.b16 %v197
    %v461 = vunpack.c.l.b16 %v198
    %v462 = vunpack.c.l.b16 %v199
    %v463 = vunpack.c.l.b16 %v200
    %v464 = vunpack.c.l.b16 %v201
    %v465 = vunpack.c.l.b16 %v202
    %v466 = vunpack.c.l.b16 %v203
    %v467 = vunpack.c.l.b16 %v204
    %v468 = vunpack.c.l.b16 %v205
    %v469 = vunpack.c.l.b16 %v206
    %v470 = vunpack.c.l.b16 %v207
    %v471 = vunpack.c.l.b16 %v208
    %v472 = vunpack.c.l.b16 %v209
    %v473 = vunpack.c.l.b16 %v210
    %v474 = vunpack.c.l.b16 %v211
    %v475 = vunpack.c.l.b16 %v212
    %v476 = vunpack.c.l.b16 %v213
    %v477 = vunpack.c.l.b16 %v214
    %v478 = vunpack.c.l.b16 %v215
    %v479 = vunpack.c.l.b16 %v216
    %v480 = vunpack.c.l.b16 %v217
    %v481 = vunpack.c.l.b16 %v218
    %v482 = vunpack.c.l.b16 %v219
    %v483 = vunpack.c.l.b16 %v220
    %v484 = vunpack.c.l.b16 %v221
    %v485 = vunpack.c.l.b16 %v222
    %v486 = vunpack.c.l.b16 %v223
    %v487 = vunpack.c.l.b16 %v224
    %v488 = vunpack.c.l.b16 %v225
    %v489 = vunpack.c.l.b16 %v226
    %v490 = vunpack.c.l.b16 %v227
    %v491 = vunpack.c.l.b16 %v228
    %v492 = vunpack.c.l.b16 %v229
    %v493 = vunpack.c.l.b16 %v230
    %v494 = vunpack.c.l.b16 %v231
    %v495 = vunpack.c.l.b16 %v232
    %v496 = vunpack.c.l.b16 %v233
    %v497 = vunpack.c.l.b16 %v234
    %v498 = vpack.c.b16 %v371, %v370
    %v499 = vpack.c.b16 %v373, %v372
    %v500 = vpack.c.b16 %v375, %v374
    %v501 = vpack.c.b16 %v377, %v376
    %v502 = vpack.c.b16 %v379, %v378
    %v503 = vpack.c.b16 %v381, %v380
    %v504 = vpack.c.b16 %v383, %v382
    %v505 = vpack.c.b16 %v385, %v384
    %v506 = vpack.c.b16 %v387, %v386
    %v507 = vpack.c.b16 %v389, %v388
    %v508 = vpack.c.b16 %v391, %v390
    %v509 = vpack.c.b16 %v393, %v392
    %v510 = vpack.c.b16 %v395, %v394
    %v511 = vpack.c.b16 %v397, %v396
    %v512 = vpack.c.b16 %v399, %v398
    %v513 = vpack.c.b16 %v401, %v400
    %v514 = vpack.c.b16 %v403, %v402
    %v515 = vpack.c.b16 %v405, %v404
    %v516 = vpack.c.b16 %v407, %v406
    %v517 = vpack.c.b16 %v409, %v408
    %v518 = vpack.c.b16 %v411, %v410
    %v519 = vpack.c.b16 %v413, %v412
    %v520 = vpack.c.b16 %v415, %v414
    %v521 = vpack.c.b16 %v417, %v416
    %v522 = vpack.c.b16 %v419, %v418
    %v523 = vpack.c.b16 %v421, %v420
    %v524 = vpack.c.b16 %v423, %v422
    %v525 = vpack.c.b16 %v425, %v424
    %v526 = vpack.c.b16 %v427, %v426
    %v527 = vpack.c.b16 %v429, %v428
    %v528 = vpack.c.b16 %v431, %v430
    %v529 = vpack.c.b16 %v433, %v432
    %v530 = vpack.c.b16 %v435, %v434
    %v531 = vpack.c.b16 %v437, %v436
    %v532 = vpack.c.b16 %v439, %v438
    %v533 = vpack.c.b16 %v441, %v440
    %v534 = vpack.c.b16 %v443, %v442
    %v535 = vpack.c.b16 %v445, %v444
    %v536 = vpack.c.b16 %v447, %v446
    %v537 = vpack.c.b16 %v449, %v448
    %v538 = vpack.c.b16 %v451, %v450
    %v539 = vpack.c.b16 %v453, %v452
    %v540 = vpack.c.b16 %v455, %v454
    %v541 = vpack.c.b16 %v457, %v456
    %v542 = vpack.c.b16 %v459, %v458
    %v543 = vpack.c.b16 %v461, %v460
    %v544 = vpack.c.b16 %v463, %v462
    %v545 = vpack.c.b16 %v465, %v464
    %v546 = vpack.c.b16 %v467, %v466
    %v547 = vpack.c.b16 %v469, %v468
    %v548 = vpack.c.b16 %v471, %v470
    %v549 = vpack.c.b16 %v473, %v472
    %v550 = vpack.c.b16 %v475, %v474
    %v551 = vpack.c.b16 %v477, %v476
    %v552 = vpack.c.b16 %v479, %v478
    %v553 = vpack.c.b16 %v481, %v480
    %v554 = vpack.c.b16 %v483, %v482
    %v555 = vpack.c.b16 %v485, %v484
    %v556 = vpack.c.b16 %v487, %v486
    %v557 = vpack.c.b16 %v489, %v488
    %v558 = vpack.c.b16 %v491, %v490
    %v559 = vpack.c.b16 %v493, %v492
    %v560 = vpack.c.b16 %v495, %v494
    %v561 = vpack.c.b16 %v497, %v496
    %626 = vmatprep.subr.bf16.mxu0 0
    %627 = vmatpush1.bf16.msra.mxu0 %v498
    %628 = vmatprep.subr.bf16.mxu0 0
    %629 = vmatpush1.bf16.msra.mxu0 %v499
    %630 = vmatprep.subr.bf16.mxu0 0
    %631 = vmatpush1.bf16.msra.mxu0 %v500
    %632 = vmatprep.subr.bf16.mxu0 0
    %633 = vmatpush1.bf16.msra.mxu0 %v501
    %634 = vmatprep.subr.bf16.mxu0 0
    %635 = vmatpush1.bf16.msra.mxu0 %v502
    %636 = vmatprep.subr.bf16.mxu0 0
    %637 = vmatpush1.bf16.msra.mxu0 %v503
    %638 = vmatprep.subr.bf16.mxu0 0
    %639 = vmatpush1.bf16.msra.mxu0 %v504
    %640 = vmatprep.subr.bf16.mxu0 0
    %641 = vmatpush1.bf16.msra.mxu0 %v505
    %642 = vmatprep.subr.bf16.mxu0 0
    %643 = vmatpush1.bf16.msra.mxu0 %v506
    %644 = vmatprep.subr.bf16.mxu0 0
    %645 = vmatpush1.bf16.msra.mxu0 %v507
    %646 = vmatprep.subr.bf16.mxu0 0
    %647 = vmatpush1.bf16.msra.mxu0 %v508
    %648 = vmatprep.subr.bf16.mxu0 0
    %649 = vmatpush1.bf16.msra.mxu0 %v509
    %650 = vmatprep.subr.bf16.mxu0 0
    %651 = vmatpush1.bf16.msra.mxu0 %v510
    %652 = vmatprep.subr.bf16.mxu0 0
    %653 = vmatpush1.bf16.msra.mxu0 %v511
    %654 = vmatprep.subr.bf16.mxu0 0
    %655 = vmatpush1.bf16.msra.mxu0 %v512
    %656 = vmatprep.subr.bf16.mxu0 0
    %657 = vmatpush1.bf16.msra.mxu0 %v513
    %658 = vmatprep.mubr.bf16.mxu0 %v100
    %659 = vmatmul.mubr.bf16.gmra.mrb[0].mxu0 %v99
    %v660 = vpop.f32.mrb[0].mxu0
    %v661 = vadd.f32 %v240, %v660
    %v662 = vpop.f32.mrb[0].mxu0
    %v663 = vpop.f32.mrb[0].mxu0
    %v664 = vadd.f32 %v240, %v663
    %v665 = vpop.f32.mrb[0].mxu0
    %666 = vdwg.mxu0
    %667 = vmatprep.subr.bf16.mxu0 0
    %668 = vmatpush1.bf16.msra.mxu0 %v514
    %669 = vmatprep.subr.bf16.mxu0 0
    %670 = vmatpush1.bf16.msra.mxu0 %v515
    %671 = vmatprep.subr.bf16.mxu0 0
    %672 = vmatpush1.bf16.msra.mxu0 %v516
    %673 = vmatprep.subr.bf16.mxu0 0
    %674 = vmatpush1.bf16.msra.mxu0 %v517
    %675 = vmatprep.subr.bf16.mxu0 0
    %676 = vmatpush1.bf16.msra.mxu0 %v518
    %677 = vmatprep.subr.bf16.mxu0 0
    %678 = vmatpush1.bf16.msra.mxu0 %v519
    %679 = vmatprep.subr.bf16.mxu0 0
    %680 = vmatpush1.bf16.msra.mxu0 %v520
    %681 = vmatprep.subr.bf16.mxu0 0
    %682 = vmatpush1.bf16.msra.mxu0 %v521
    %683 = vmatprep.subr.bf16.mxu0 0
    %684 = vmatpush1.bf16.msra.mxu0 %v522
    %685 = vmatprep.subr.bf16.mxu0 0
    %686 = vmatpush1.bf16.msra.mxu0 %v523
    %687 = vmatprep.subr.bf16.mxu0 0
    %688 = vmatpush1.bf16.msra.mxu0 %v524
    %689 = vmatprep.subr.bf16.mxu0 0
    %690 = vmatpush1.bf16.msra.mxu0 %v525
    %691 = vmatprep.subr.bf16.mxu0 0
    %692 = vmatpush1.bf16.msra.mxu0 %v526
    %693 = vmatprep.subr.bf16.mxu0 0
    %694 = vmatpush1.bf16.msra.mxu0 %v527
    %695 = vmatprep.subr.bf16.mxu0 0
    %696 = vmatpush1.bf16.msra.mxu0 %v528
    %697 = vmatprep.subr.bf16.mxu0 0
    %698 = vmatpush1.bf16.msra.mxu0 %v529
    %699 = vmatprep.mubr.bf16.mxu0 %v102
    %700 = vmatmul.mubr.bf16.gmra.mrb[0].mxu0 %v101
    %v701 = vpop.f32.mrb[0].mxu0
    %v702 = vadd.f32 %v661, %v701
    %v703 = vpop.f32.mrb[0].mxu0
    %v704 = vpop.f32.mrb[0].mxu0
    %v705 = vadd.f32 %v664, %v704
    %v706 = vpop.f32.mrb[0].mxu0
    %707 = vdwg.mxu0
    %708 = vmatprep.subr.bf16.mxu0 0
    %709 = vmatpush1.bf16.msra.mxu0 %v530
    %710 = vmatprep.subr.bf16.mxu0 0
    %711 = vmatpush1.bf16.msra.mxu0 %v531
    %712 = vmatprep.subr.bf16.mxu0 0
    %713 = vmatpush1.bf16.msra.mxu0 %v532
    %714 = vmatprep.subr.bf16.mxu0 0
    %715 = vmatpush1.bf16.msra.mxu0 %v533
    %716 = vmatprep.subr.bf16.mxu0 0
    %717 = vmatpush1.bf16.msra.mxu0 %v534
    %718 = vmatprep.subr.bf16.mxu0 0
    %719 = vmatpush1.bf16.msra.mxu0 %v535
    %720 = vmatprep.subr.bf16.mxu0 0
    %721 = vmatpush1.bf16.msra.mxu0 %v536
    %722 = vmatprep.subr.bf16.mxu0 0
    %723 = vmatpush1.bf16.msra.mxu0 %v537
    %724 = vmatprep.subr.bf16.mxu0 0
    %725 = vmatpush1.bf16.msra.mxu0 %v538
    %726 = vmatprep.subr.bf16.mxu0 0
    %727 = vmatpush1.bf16.msra.mxu0 %v539
    %728 = vmatprep.subr.bf16.mxu0 0
    %729 = vmatpush1.bf16.msra.mxu0 %v540
    %730 = vmatprep.subr.bf16.mxu0 0
    %731 = vmatpush1.bf16.msra.mxu0 %v541
    %732 = vmatprep.subr.bf16.mxu0 0
    %733 = vmatpush1.bf16.msra.mxu0 %v542
    %734 = vmatprep.subr.bf16.mxu0 0
    %735 = vmatpush1.bf16.msra.mxu0 %v543
    %736 = vmatprep.subr.bf16.mxu0 0
    %737 = vmatpush1.bf16.msra.mxu0 %v544
    %738 = vmatprep.subr.bf16.mxu0 0
    %739 = vmatpush1.bf16.msra.mxu0 %v545
    %740 = vmatprep.mubr.bf16.mxu0 %v104
    %741 = vmatmul.mubr.bf16.gmra.mrb[0].mxu0 %v103
    %v742 = vpop.f32.mrb[0].mxu0
    %v743 = vadd.f32 %v702, %v742
    %v744 = vpop.f32.mrb[0].mxu0
    %v745 = vpop.f32.mrb[0].mxu0
    %v746 = vadd.f32 %v705, %v745
    %v747 = vpop.f32.mrb[0].mxu0
    %748 = vdwg.mxu0
    %749 = vmatprep.subr.bf16.mxu0 0
    %750 = vmatpush1.bf16.msra.mxu0 %v546
    %751 = vmatprep.subr.bf16.mxu0 0
    %752 = vmatpush1.bf16.msra.mxu0 %v547
    %753 = vmatprep.subr.bf16.mxu0 0
    %754 = vmatpush1.bf16.msra.mxu0 %v548
    %755 = vmatprep.subr.bf16.mxu0 0
    %756 = vmatpush1.bf16.msra.mxu0 %v549
    %757 = vmatprep.subr.bf16.mxu0 0
    %758 = vmatpush1.bf16.msra.mxu0 %v550
    %759 = vmatprep.subr.bf16.mxu0 0
    %760 = vmatpush1.bf16.msra.mxu0 %v551
    %761 = vmatprep.subr.bf16.mxu0 0
    %762 = vmatpush1.bf16.msra.mxu0 %v552
    %763 = vmatprep.subr.bf16.mxu0 0
    %764 = vmatpush1.bf16.msra.mxu0 %v553
    %765 = vmatprep.subr.bf16.mxu0 0
    %766 = vmatpush1.bf16.msra.mxu0 %v554
    %767 = vmatprep.subr.bf16.mxu0 0
    %768 = vmatpush1.bf16.msra.mxu0 %v555
    %769 = vmatprep.subr.bf16.mxu0 0
    %770 = vmatpush1.bf16.msra.mxu0 %v556
    %771 = vmatprep.subr.bf16.mxu0 0
    %772 = vmatpush1.bf16.msra.mxu0 %v557
    %773 = vmatprep.subr.bf16.mxu0 0
    %774 = vmatpush1.bf16.msra.mxu0 %v558
    %775 = vmatprep.subr.bf16.mxu0 0
    %776 = vmatpush1.bf16.msra.mxu0 %v559
    %777 = vmatprep.subr.bf16.mxu0 0
    %778 = vmatpush1.bf16.msra.mxu0 %v560
    %779 = vmatprep.subr.bf16.mxu0 0
    %780 = vmatpush1.bf16.msra.mxu0 %v561
    %781 = vmatprep.mubr.bf16.mxu0 %v106
    %782 = vmatmul.mubr.bf16.gmra.mrb[0].mxu0 %v105
    %v783 = vpop.f32.mrb[0].mxu0
    %v784 = vadd.f32 %v743, %v783
    %v785 = vpop.f32.mrb[0].mxu0
    %v786 = vpop.f32.mrb[0].mxu0
    %v787 = vadd.f32 %v746, %v786
    %v788 = vpop.f32.mrb[0].mxu0
    %789 = vdwg.mxu0
    %v790 = vmax.f32 %v784, 0.0
    %v791 = vmax.f32 %v787, 0.0
    %v792 = vpack.c.bf16 %v791, %v790
    %v793 = vld [vmem:[#allocation7] sm:$0xf]
    %v794 = vld [vmem:[#allocation7 + $0x4] sm:$0xf]
    %v795 = vld [vmem:[#allocation7 + $0x8] sm:$0xf]
    %v796 = vld [vmem:[#allocation7 + $0xc] sm:$0xf]
    %v797 = vld [vmem:[#allocation7 + $0x10] sm:$0xf]
    %v798 = vld [vmem:[#allocation7 + $0x14] sm:$0xf]
    %v799 = vld [vmem:[#allocation7 + $0x18] sm:$0xf]
    %v800 = vld [vmem:[#allocation7 + $0x1c] sm:$0xf]
    %v801 = vld [vmem:[#allocation7 + $0x20] sm:$0xf]
    %v802 = vld [vmem:[#allocation7 + $0x24] sm:$0xf]
    %v803 = vld [vmem:[#allocation7 + $0x28] sm:$0xf]
    %v804 = vld [vmem:[#allocation7 + $0x2c] sm:$0xf]
    %v805 = vld [vmem:[#allocation7 + $0x30] sm:$0xf]
    %v806 = vld [vmem:[#allocation7 + $0x34] sm:$0xf]
    %v807 = vld [vmem:[#allocation7 + $0x38] sm:$0xf]
    %v808 = vld [vmem:[#allocation7 + $0x3c] sm:$0xf]
    %v809 = vld [vmem:[%s4] sm:$0x1]
    %v811 = vlaneseq
    %v812 = vshrl.u32 %v811, 7
    %v813 = vsub.s32 0, %v812
    %v814 = vrot.slane %v809, %v813
    %v832 = vunpack.c.l.b16 %v793
    %v833 = vunpack.c.l.b16 %v794
    %v834 = vunpack.c.l.b16 %v795
    %v835 = vunpack.c.l.b16 %v796
    %v836 = vunpack.c.l.b16 %v797
    %v837 = vunpack.c.l.b16 %v798
    %v838 = vunpack.c.l.b16 %v799
    %v839 = vunpack.c.l.b16 %v800
    %v840 = vunpack.c.l.b16 %v801
    %v841 = vunpack.c.l.b16 %v802
    %v842 = vunpack.c.l.b16 %v803
    %v843 = vunpack.c.l.b16 %v804
    %v844 = vunpack.c.l.b16 %v805
    %v845 = vunpack.c.l.b16 %v806
    %v846 = vunpack.c.l.b16 %v807
    %v847 = vunpack.c.l.b16 %v808
    %v848 = vpack.c.b16 %v833, %v832
    %v849 = vpack.c.b16 %v835, %v834
    %v850 = vpack.c.b16 %v837, %v836
    %v851 = vpack.c.b16 %v839, %v838
    %v852 = vpack.c.b16 %v841, %v840
    %v853 = vpack.c.b16 %v843, %v842
    %v854 = vpack.c.b16 %v845, %v844
    %v855 = vpack.c.b16 %v847, %v846
    %864 = vmatprep.subr.bf16.mxu0 0
    %865 = vmatpush1.bf16.msra.mxu0 %v848
    %866 = vmatprep.subr.bf16.mxu0 0
    %867 = vmatpush1.bf16.msra.mxu0 %v849
    %868 = vmatprep.subr.bf16.mxu0 0
    %869 = vmatpush1.bf16.msra.mxu0 %v850
    %870 = vmatprep.subr.bf16.mxu0 0
    %871 = vmatpush1.bf16.msra.mxu0 %v851
    %872 = vmatprep.subr.bf16.mxu0 0
    %873 = vmatpush1.bf16.msra.mxu0 %v852
    %874 = vmatprep.subr.bf16.mxu0 0
    %875 = vmatpush1.bf16.msra.mxu0 %v853
    %876 = vmatprep.subr.bf16.mxu0 0
    %877 = vmatpush1.bf16.msra.mxu0 %v854
    %878 = vmatprep.subr.bf16.mxu0 0
    %879 = vmatpush1.bf16.msra.mxu0 %v855
    %880 = vmatprep.subr.bf16.mxu0 0
    %881 = vmatpush1.bf16.msra.mxu0 0
    %882 = vmatprep.subr.bf16.mxu0 0
    %883 = vmatpush1.bf16.msra.mxu0 0
    %884 = vmatprep.subr.bf16.mxu0 0
    %885 = vmatpush1.bf16.msra.mxu0 0
    %886 = vmatprep.subr.bf16.mxu0 0
    %887 = vmatpush1.bf16.msra.mxu0 0
    %888 = vmatprep.subr.bf16.mxu0 0
    %889 = vmatpush1.bf16.msra.mxu0 0
    %890 = vmatprep.subr.bf16.mxu0 0
    %891 = vmatpush1.bf16.msra.mxu0 0
    %892 = vmatprep.subr.bf16.mxu0 0
    %893 = vmatpush1.bf16.msra.mxu0 0
    %894 = vmatprep.subr.bf16.mxu0 0
    %895 = vmatpush1.bf16.msra.mxu0 0
    %896 = vmatprep.mubr.bf16.mxu0 0
    %897 = vmatmul.mubr.bf16.gmra.mrb[0].mxu0 %v792
    %v898 = vpop.f32.mrb[0].mxu0
    %v899 = vadd.f32 %v814, %v898
    %v900 = vpop.f32.mrb[0].mxu0
    %v901 = vpop.f32.mrb[0].mxu0
    %v902 = vadd.f32 %v814, %v901
    %v903 = vpop.f32.mrb[0].mxu0
    %904 = vdwg.mxu0
    %v905 = vmax.f32 %v899, 0.0
    %v906 = vmax.f32 %v902, 0.0
    %v907 = vpack.c.bf16 %v906, %v905
    %v908 = vld [vmem:[#allocation8] sm:$0xf]
    %v909 = vld [vmem:[#allocation8 + $0x4] sm:$0xf]
    %v910 = vld [vmem:[#allocation8 + $0x8] sm:$0xf]
    %v911 = vld [vmem:[#allocation8 + $0xc] sm:$0xf]
    %v912 = vld [vmem:[#allocation8 + $0x10] sm:$0xf]
    %v913 = vld [vmem:[#allocation8 + $0x14] sm:$0xf]
    %v914 = vld [vmem:[#allocation8 + $0x18] sm:$0xf]
    %v915 = vld [vmem:[#allocation8 + $0x1c] sm:$0xf]
    %v916 = vld [vmem:[#allocation8 + $0x20] sm:$0xf]
    %v917 = vld [vmem:[#allocation8 + $0x24] sm:$0xf]
    %v918 = vld [vmem:[#allocation8 + $0x28] sm:$0xf]
    %v919 = vld [vmem:[#allocation8 + $0x2c] sm:$0xf]
    %v920 = vld [vmem:[#allocation8 + $0x30] sm:$0xf]
    %v921 = vld [vmem:[#allocation8 + $0x34] sm:$0xf]
    %v922 = vld [vmem:[#allocation8 + $0x38] sm:$0xf]
    %v923 = vld [vmem:[#allocation8 + $0x3c] sm:$0xf]
    %v924 = vld [vmem:[%s6] sm:$0x1]
    %v926 = vlaneseq
    %v927 = vshrl.u32 %v926, 7
    %v928 = vsub.s32 0, %v927
    %v929 = vrot.slane %v924, %v928
    %v947 = vunpack.c.l.b16 %v908
    %v948 = vunpack.c.l.b16 %v909
    %v949 = vunpack.c.l.b16 %v910
    %v950 = vunpack.c.l.b16 %v911
    %v951 = vunpack.c.l.b16 %v912
    %v952 = vunpack.c.l.b16 %v913
    %v953 = vunpack.c.l.b16 %v914
    %v954 = vunpack.c.l.b16 %v915
    %v955 = vunpack.c.l.b16 %v916
    %v956 = vunpack.c.l.b16 %v917
    %v957 = vunpack.c.l.b16 %v918
    %v958 = vunpack.c.l.b16 %v919
    %v959 = vunpack.c.l.b16 %v920
    %v960 = vunpack.c.l.b16 %v921
    %v961 = vunpack.c.l.b16 %v922
    %v962 = vunpack.c.l.b16 %v923
    %v963 = vpack.c.b16 %v948, %v947
    %v964 = vpack.c.b16 %v950, %v949
    %v965 = vpack.c.b16 %v952, %v951
    %v966 = vpack.c.b16 %v954, %v953
    %v967 = vpack.c.b16 %v956, %v955
    %v968 = vpack.c.b16 %v958, %v957
    %v969 = vpack.c.b16 %v960, %v959
    %v970 = vpack.c.b16 %v962, %v961
    %979 = vmatprep.subr.bf16.mxu0 0
    %980 = vmatpush1.bf16.msra.mxu0 %v963
    %981 = vmatprep.subr.bf16.mxu0 0
    %982 = vmatpush1.bf16.msra.mxu0 %v964
    %983 = vmatprep.subr.bf16.mxu0 0
    %984 = vmatpush1.bf16.msra.mxu0 %v965
    %985 = vmatprep.subr.bf16.mxu0 0
    %986 = vmatpush1.bf16.msra.mxu0 %v966
    %987 = vmatprep.subr.bf16.mxu0 0
    %988 = vmatpush1.bf16.msra.mxu0 %v967
    %989 = vmatprep.subr.bf16.mxu0 0
    %990 = vmatpush1.bf16.msra.mxu0 %v968
    %991 = vmatprep.subr.bf16.mxu0 0
    %992 = vmatpush1.bf16.msra.mxu0 %v969
    %993 = vmatprep.subr.bf16.mxu0 0
    %994 = vmatpush1.bf16.msra.mxu0 %v970
    %995 = vmatprep.subr.bf16.mxu0 0
    %996 = vmatpush1.bf16.msra.mxu0 0
    %997 = vmatprep.subr.bf16.mxu0 0
    %998 = vmatpush1.bf16.msra.mxu0 0
    %999 = vmatprep.subr.bf16.mxu0 0
    %1000 = vmatpush1.bf16.msra.mxu0 0
    %1001 = vmatprep.subr.bf16.mxu0 0
    %1002 = vmatpush1.bf16.msra.mxu0 0
    %1003 = vmatprep.subr.bf16.mxu0 0
    %1004 = vmatpush1.bf16.msra.mxu0 0
    %1005 = vmatprep.subr.bf16.mxu0 0
    %1006 = vmatpush1.bf16.msra.mxu0 0
    %1007 = vmatprep.subr.bf16.mxu0 0
    %1008 = vmatpush1.bf16.msra.mxu0 0
    %1009 = vmatprep.subr.bf16.mxu0 0
    %1010 = vmatpush1.bf16.msra.mxu0 0
    %1011 = vmatprep.mubr.bf16.mxu0 0
    %1012 = vmatmul.mubr.bf16.gmra.mrb[0].mxu0 %v907
    %v1013 = vpop.f32.mrb[0].mxu0
    %v1014 = vadd.f32 %v929, %v1013
    %v1015 = vpop.f32.mrb[0].mxu0
    %v1016 = vpop.f32.mrb[0].mxu0
    %v1017 = vadd.f32 %v929, %v1016
    %v1018 = vpop.f32.mrb[0].mxu0
    %1019 = vdwg.mxu0
    %v1020 = vlaneseq
    %v1021 = vand.u32 %v1020, 127
    %vm1022 = vcmp.lt.s32.totalorder %v1021, 10
    %v1023 = vsel %vm1022, %v1014, -inf
    %v1024 = vsel %vm1022, %v1017, -inf
    %1025 = vmax.xlane.f32.xlu0 %v1023
    %v1026 = vpop.xlane.xlu0 %1025
    %1027 = vmax.xlane.f32.xlu0 %v1024
    %v1028 = vpop.xlane.xlu0 %1027
    %v1029 = vsub.f32 %v1023, %v1026
    %v1030 = vsub.f32 %v1024, %v1028
    %v1031 = vmul.f32 %v1029, 1.442695
    %v1032 = vpow.pop %v1031
    %v1033 = vmul.f32 %v1030, 1.442695
    %v1034 = vpow.pop %v1033
    %1035 = vadd.xlane.f32.xlu0 %v1032
    %v1036 = vpop.xlane.xlu0 %1035
    %1037 = vadd.xlane.f32.xlu0 %v1034
    %v1038 = vpop.xlane.xlu0 %1037
    %v1039 = vlog2.pop %v1036
    %v1040 = vmul.f32 %v1039, 0.6931472
    %v1041 = vlog2.pop %v1038
    %v1042 = vmul.f32 %v1041, 0.6931472
    %v1043 = vadd.f32 %v1026, %v1040
    %v1044 = vadd.f32 %v1028, %v1042
    %v1045 = vsub.f32 %v1023, %v1043
    %v1046 = vsub.f32 %v1024, %v1044
    %1047 = vst [vmem:[#allocation10] sm:$0xff] %v1045
    %1048 = vst [vmem:[#allocation10 + $0x8] sm:$0xff] %v1046
    // Predicated region
    $region46: #{tpu_custom_call.1} parent=1 // pred_check
      _
    $region47: #{tpu_custom_call.1} parent=1 // pred_check_branch
      %1050 = sbr.rel (0) target = $region49
    $region48: #{tpu_custom_call.1} parent=1 // pred_region
      %s1052 = ssub.s32 256, 256
      %1053 = vsyncadd [#allocation4], %s1052
      %s1054 = sshll.u32 [#allocation10], 4
      %s1055 = int_to_ptr.vmem [resolvable:$true] %s1054
      %1060 = dma.vmem_to_hbm [thread:$0]  %s1055, 256, %s7, [#allocation4], 128, 128, 8
    $region49: #{tpu_custom_call.1} parent=1 // pred_fallthru
      _
    // Predicated region
    $region50: #{tpu_custom_call.1} parent=1 // pred_check
      _
    $region51: #{tpu_custom_call.1} parent=1 // pred_check_branch
      %1062 = sbr.rel (0) target = $region53
    $region52: #{tpu_custom_call.1} parent=1 // pred_region
      %1063 = dma.done [#allocation4], 256
    $region53: #{tpu_custom_call.1} parent=1 // pred_fallthru
      _
    %1064 = vsyncpa [#allocation3], 1
    %1065 = vsyncpa [#allocation6], 1
    %1066 = vsyncpa [#allocation9], 1
    %1067 = vsyncpa [#allocation4], 1

// kernel: tpu_custom_call.1
$region0: #{tpu_custom_call.1}
  #allocation0 [shape = 'u32[]', space=smem, size = 0x4, offset = 0x4, fixed_abs, tag = 'smem constant byte address 0x4 - core index']
  #allocation1 [shape = 'u32[144,128]{1,0:T(1,128)}', space=vmem, size = 0x12000, scoped, tag = 'internal scratch']
  %s0 = inlined_call_operand.hbm [shape: f32[16,1024], index: 0, kind: input, shape index: {}]
  %s1 = inlined_call_operand.hbm [shape: bf16[1024,128], index: 1, kind: input, shape index: {}]
  %s2 = inlined_call_operand.vmem [shape: f32[1,128], index: 2, kind: input, shape index: {}]
  %s3 = inlined_call_operand.hbm [shape: bf16[128,128], index: 3, kind: input, shape index: {}]
  %s4 = inlined_call_operand.vmem [shape: f32[1,128], index: 4, kind: input, shape index: {}]
  %s5 = inlined_call_operand.hbm [shape: bf16[128,128], index: 5, kind: input, shape index: {}]
  %s6 = inlined_call_operand.vmem [shape: f32[1,128], index: 6, kind: input, shape index: {}]
  %s7 = inlined_call_operand.hbm [shape: f32[16,128], index: 7, kind: output, shape index: {}]
  %s8 = sld [smem:[#allocation0]]
  $region54: #{tpu_custom_call.1} parent=0
    _
  %s10 = ssub.s32 1, %s8
  %s11 = scalar_select 0, %s10, %s8
  $region1: #{tpu_custom_call.1} parent=0
    #allocation2 [shape = 'u8[65536]{0}', space=vmem, size = 0x10000, scoped, tag = 'input window, operand 0, single buffered']
    #allocation3 [shape = 's32[1]{0}', space=sflag, size = 0x4, scoped, tag = 'scoped memory for tpu_custom_call.1']
    #allocation4 [shape = 's32[1]{0}', space=sflag, size = 0x4, scoped, tag = 'scoped memory for tpu_custom_call.1']
    #allocation5 [shape = 'u8[262144]{0}', space=vmem, size = 0x40000, scoped, tag = 'input window, operand 1, single buffered']
    #allocation6 [shape = 's32[1]{0}', space=sflag, size = 0x4, scoped, tag = 'scoped memory for tpu_custom_call.1']
    #allocation7 [shape = 'u8[32768]{0}', space=vmem, size = 0x8000, scoped, tag = 'input window, operand 3, single buffered']
    #allocation8 [shape = 'u8[32768]{0}', space=vmem, size = 0x8000, scoped, tag = 'input window, operand 5, single buffered']
    #allocation9 [shape = 's32[1]{0}', space=sflag, size = 0x4, scoped, tag = 'scoped memory for tpu_custom_call.1']
    #allocation10 [shape = 'u8[8192]{0}', space=vmem, size = 0x2000, scoped, tag = 'output window, operand 0, single buffered']
    %12 = vsyncpa [#allocation3], 0
    %13 = vsyncpa [#allocation6], 0
    %14 = vsyncpa [#allocation9], 0
    %15 = vsyncpa [#allocation4], 0
    // Predicated region
    $region2: #{tpu_custom_call.1} parent=1 // pred_check
      _
    $region3: #{tpu_custom_call.1} parent=1 // pred_check_branch
      %17 = sbr.rel (0) target = $region5
    $region4: #{tpu_custom_call.1} parent=1 // pred_region
      %s19 = ssub.s32 2048, 2048
      %20 = vsyncadd [#allocation3], %s19
      %s21 = sshll.u32 [#allocation2], 4
      %s22 = int_to_ptr.vmem [resolvable:$true] %s21
      %27 = dma.hbm_to_vmem [thread:$0]  %s0, 2048, %s22, [#allocation3], 1024, 1024, 64
    $region5: #{tpu_custom_call.1} parent=1 // pred_fallthru
      _
    // Predicated region
    $region6: #{tpu_custom_call.1} parent=1 // pred_check
      _
    $region7: #{tpu_custom_call.1} parent=1 // pred_check_branch
      %29 = sbr.rel (0) target = $region9
    $region8: #{tpu_custom_call.1} parent=1 // pred_region
      %s31 = ssub.s32 8192, 8192
      %32 = vsyncadd [#allocation6], %s31
      %s33 = sshll.u32 [#allocation5], 4
      %s34 = int_to_ptr.vmem [resolvable:$true] %s33
      %39 = dma.hbm_to_vmem [thread:$0]  %s1, 8192, %s34, [#allocation6], 64, 64, 4
    $region9: #{tpu_custom_call.1} parent=1 // pred_fallthru
      _
    // Predicated region
    $region10: #{tpu_custom_call.1} parent=1 // pred_check
      _
    $region11: #{tpu_custom_call.1} parent=1 // pred_check_branch
      %41 = sbr.rel (0) target = $region13
    $region12: #{tpu_custom_call.1} parent=1 // pred_region
      _
    $region13: #{tpu_custom_call.1} parent=1 // pred_fallthru
      _
    // Predicated region
    $region14: #{tpu_custom_call.1} parent=1 // pred_check
      _
    $region15: #{tpu_custom_call.1} parent=1 // pred_check_branch
      %43 = sbr.rel (0) target = $region17
    $region16: #{tpu_custom_call.1} parent=1 // pred_region
      %s45 = ssub.s32 1024, 1024
      %46 = vsyncadd [#allocation6], %s45
      %s47 = sshll.u32 [#allocation7], 4
      %s48 = int_to_ptr.vmem [resolvable:$true] %s47
      %53 = dma.hbm_to_vmem [thread:$0]  %s3, 1024, %s48, [#allocation6], 64, 64, 4
    $region17: #{tpu_custom_call.1} parent=1 // pred_fallthru
      _
    // Predicated region
    $region18: #{tpu_custom_call.1} parent=1 // pred_check
      _
    $region19: #{tpu_custom_call.1} parent=1 // pred_check_branch
      %55 = sbr.rel (0) target = $region21
    $region20: #{tpu_custom_call.1} parent=1 // pred_region
      _
    $region21: #{tpu_custom_call.1} parent=1 // pred_fallthru
      _
    // Predicated region
    $region22: #{tpu_custom_call.1} parent=1 // pred_check
      _
    $region23: #{tpu_custom_call.1} parent=1 // pred_check_branch
      %57 = sbr.rel (0) target = $region25
    $region24: #{tpu_custom_call.1} parent=1 // pred_region
      %s59 = ssub.s32 1024, 1024
      %60 = vsyncadd [#allocation9], %s59
      %s61 = sshll.u32 [#allocation8], 4
      %s62 = int_to_ptr.vmem [resolvable:$true] %s61
      %67 = dma.hbm_to_vmem [thread:$0]  %s5, 1024, %s62, [#allocation9], 64, 64, 4
    $region25: #{tpu_custom_call.1} parent=1 // pred_fallthru
      _
    // Predicated region
    $region26: #{tpu_custom_call.1} parent=1 // pred_check
      _
    $region27: #{tpu_custom_call.1} parent=1 // pred_check_branch
      %69 = sbr.rel (0) target = $region29
    $region28: #{tpu_custom_call.1} parent=1 // pred_region
      _
    $region29: #{tpu_custom_call.1} parent=1 // pred_fallthru
      _
    // Predicated region
    $region30: #{tpu_custom_call.1} parent=1 // pred_check
      _
    $region31: #{tpu_custom_call.1} parent=1 // pred_check_branch
      %71 = sbr.rel (0) target = $region33
    $region32: #{tpu_custom_call.1} parent=1 // pred_region
      %72 = dma.done [#allocation3], 2048
    $region33: #{tpu_custom_call.1} parent=1 // pred_fallthru
      _
    // Predicated region
    $region34: #{tpu_custom_call.1} parent=1 // pred_check
      _
    $region35: #{tpu_custom_call.1} parent=1 // pred_check_branch
      %74 = sbr.rel (0) target = $region37
    $region36: #{tpu_custom_call.1} parent=1 // pred_region
      %75 = dma.done [#allocation6], 8192
    $region37: #{tpu_custom_call.1} parent=1 // pred_fallthru
      _
    // Predicated region
    $region38: #{tpu_custom_call.1} parent=1 // pred_check
      _
    $region39: #{tpu_custom_call.1} parent=1 // pred_check_branch
      %77 = sbr.rel (0) target = $region41
    $region40: #{tpu_custom_call.1} parent=1 // pred_region
      %78 = dma.done [#allocation6], 1024
    $region41: #{tpu_custom_call.1} parent=1 // pred_fallthru
      _
    // Predicated region
    $region42: #{tpu_custom_call.1} parent=1 // pred_check
      _
    $region43: #{tpu_custom_call.1} parent=1 // pred_check_branch
      %80 = sbr.rel (0) target = $region45
    $region44: #{tpu_custom_call.1} parent=1 // pred_region
      %81 = dma.done [#allocation9], 1024
    $region45: #{tpu_custom_call.1} parent=1 // pred_fallthru
      _
    %v83 = vld [vmem:[#allocation2] sm:$0xff]
    %v84 = vld [vmem:[#allocation2 + $0x8] sm:$0xff]
    %v85 = vld [vmem:[#allocation2 + $0x10] sm:$0xff]
    %v86 = vld [vmem:[#allocation2 + $0x18] sm:$0xff]
    %v87 = vld [vmem:[#allocation2 + $0x20] sm:$0xff]
    %v88 = vld [vmem:[#allocation2 + $0x28] sm:$0xff]
    %v89 = vld [vmem:[#allocation2 + $0x30] sm:$0xff]
    %v90 = vld [vmem:[#allocation2 + $0x38] sm:$0xff]
    %v91 = vld [vmem:[#allocation2 + $0x40] sm:$0xff]
    %v92 = vld [vmem:[#allocation2 + $0x48] sm:$0xff]
    %v93 = vld [vmem:[#allocation2 + $0x50] sm:$0xff]
    %v94 = vld [vmem:[#allocation2 + $0x58] sm:$0xff]
    %v95 = vld [vmem:[#allocation2 + $0x60] sm:$0xff]
    %v96 = vld [vmem:[#allocation2 + $0x68] sm:$0xff]
    %v97 = vld [vmem:[#allocation2 + $0x70] sm:$0xff]
    %v98 = vld [vmem:[#allocation2 + $0x78] sm:$0xff]
    %v99 = vpack.c.bf16 %v91, %v83
    %v100 = vpack.c.bf16 %v92, %v84
    %v101 = vpack.c.bf16 %v93, %v85
    %v102 = vpack.c.bf16 %v94, %v86
    %v103 = vpack.c.bf16 %v95, %v87
    %v104 = vpack.c.bf16 %v96, %v88
    %v105 = vpack.c.bf16 %v97, %v89
    %v106 = vpack.c.bf16 %v98, %v90
    %v107 = vld [vmem:[#allocation5] sm:$0xf]
    %v108 = vld [vmem:[#allocation5 + $0x4] sm:$0xf]
    %v109 = vld [vmem:[#allocation5 + $0x8] sm:$0xf]
    %v110 = vld [vmem:[#allocation5 + $0xc] sm:$0xf]
    %v111 = vld [vmem:[#allocation5 + $0x10] sm:$0xf]
    %v112 = vld [vmem:[#allocation5 + $0x14] sm:$0xf]
    %v113 = vld [vmem:[#allocation5 + $0x18] sm:$0xf]
    %v114 = vld [vmem:[#allocation5 + $0x1c] sm:$0xf]
    %v115 = vld [vmem:[#allocation5 + $0x20] sm:$0xf]
    %v116 = vld [vmem:[#allocation5 + $0x24] sm:$0xf]
    %v117 = vld [vmem:[#allocation5 + $0x28] sm:$0xf]
    %v118 = vld [vmem:[#allocation5 + $0x2c] sm:$0xf]
    %v119 = vld [vmem:[#allocation5 + $0x30] sm:$0xf]
    %v120 = vld [vmem:[#allocation5 + $0x34] sm:$0xf]
    %v121 = vld [vmem:[#allocation5 + $0x38] sm:$0xf]
    %v122 = vld [vmem:[#allocation5 + $0x3c] sm:$0xf]
    %v123 = vld [vmem:[#allocation5 + $0x40] sm:$0xf]
    %v124 = vld [vmem:[#allocation5 + $0x44] sm:$0xf]
    %v125 = vld [vmem:[#allocation5 + $0x48] sm:$0xf]
    %v126 = vld [vmem:[#allocation5 + $0x4c] sm:$0xf]
    %v127 = vld [vmem:[#allocation5 + $0x50] sm:$0xf]
    %v128 = vld [vmem:[#allocation5 + $0x54] sm:$0xf]
    %v129 = vld [vmem:[#allocation5 + $0x58] sm:$0xf]
    %v130 = vld [vmem:[#allocation5 + $0x5c] sm:$0xf]
    %v131 = vld [vmem:[#allocation5 + $0x60] sm:$0xf]
    %v132 = vld [vmem:[#allocation5 + $0x64] sm:$0xf]
    %v133 = vld [vmem:[#allocation5 + $0x68] sm:$0xf]
    %v134 = vld [vmem:[#allocation5 + $0x6c] sm:$0xf]
    %v135 = vld [vmem:[#allocation5 + $0x70] sm:$0xf]
    %v136 = vld [vmem:[#allocation5 + $0x74] sm:$0xf]
    %v137 = vld [vmem:[#allocation5 + $0x78] sm:$0xf]
    %v138 = vld [vmem:[#allocation5 + $0x7c] sm:$0xf]
    %v139 = vld [vmem:[#allocation5 + $0x80] sm:$0xf]
    %v140 = vld [vmem:[#allocation5 + $0x84] sm:$0xf]
    %v141 = vld [vmem:[#allocation5 + $0x88] sm:$0xf]
    %v142 = vld [vmem:[#allocation5 + $0x8c] sm:$0xf]
    %v143 = vld [vmem:[#allocation5 + $0x90] sm:$0xf]
    %v144 = vld [vmem:[#allocation5 + $0x94] sm:$0xf]
    %v145 = vld [vmem:[#allocation5 + $0x98] sm:$0xf]
    %v146 = vld [vmem:[#allocation5 + $0x9c] sm:$0xf]
    %v147 = vld [vmem:[#allocation5 + $0xa0] sm:$0xf]
    %v148 = vld [vmem:[#allocation5 + $0xa4] sm:$0xf]
    %v149 = vld [vmem:[#allocation5 + $0xa8] sm:$0xf]
    %v150 = vld [vmem:[#allocation5 + $0xac] sm:$0xf]
    %v151 = vld [vmem:[#allocation5 + $0xb0] sm:$0xf]
    %v152 = vld [vmem:[#allocation5 + $0xb4] sm:$0xf]
    %v153 = vld [vmem:[#allocation5 + $0xb8] sm:$0xf]
    %v154 = vld [vmem:[#allocation5 + $0xbc] sm:$0xf]
    %v155 = vld [vmem:[#allocation5 + $0xc0] sm:$0xf]
    %v156 = vld [vmem:[#allocation5 + $0xc4] sm:$0xf]
    %v157 = vld [vmem:[#allocation5 + $0xc8] sm:$0xf]
    %v158 = vld [vmem:[#allocation5 + $0xcc] sm:$0xf]
    %v159 = vld [vmem:[#allocation5 + $0xd0] sm:$0xf]
    %v160 = vld [vmem:[#allocation5 + $0xd4] sm:$0xf]
    %v161 = vld [vmem:[#allocation5 + $0xd8] sm:$0xf]
    %v162 = vld [vmem:[#allocation5 + $0xdc] sm:$0xf]
    %v163 = vld [vmem:[#allocation5 + $0xe0] sm:$0xf]
    %v164 = vld [vmem:[#allocation5 + $0xe4] sm:$0xf]
    %v165 = vld [vmem:[#allocation5 + $0xe8] sm:$0xf]
    %v166 = vld [vmem:[#allocation5 + $0xec] sm:$0xf]
    %v167 = vld [vmem:[#allocation5 + $0xf0] sm:$0xf]
    %v168 = vld [vmem:[#allocation5 + $0xf4] sm:$0xf]
    %v169 = vld [vmem:[#allocation5 + $0xf8] sm:$0xf]
    %v170 = vld [vmem:[#allocation5 + $0xfc] sm:$0xf]
    %v171 = vld [vmem:[#allocation5 + $0x100] sm:$0xf]
    %v172 = vld [vmem:[#allocation5 + $0x104] sm:$0xf]
    %v173 = vld [vmem:[#allocation5 + $0x108] sm:$0xf]
    %v174 = vld [vmem:[#allocation5 + $0x10c] sm:$0xf]
    %v175 = vld [vmem:[#allocation5 + $0x110] sm:$0xf]
    %v176 = vld [vmem:[#allocation5 + $0x114] sm:$0xf]
    %v177 = vld [vmem:[#allocation5 + $0x118] sm:$0xf]
    %v178 = vld [vmem:[#allocation5 + $0x11c] sm:$0xf]
    %v179 = vld [vmem:[#allocation5 + $0x120] sm:$0xf]
    %v180 = vld [vmem:[#allocation5 + $0x124] sm:$0xf]
    %v181 = vld [vmem:[#allocation5 + $0x128] sm:$0xf]
    %v182 = vld [vmem:[#allocation5 + $0x12c] sm:$0xf]
    %v183 = vld [vmem:[#allocation5 + $0x130] sm:$0xf]
    %v184 = vld [vmem:[#allocation5 + $0x134] sm:$0xf]
    %v185 = vld [vmem:[#allocation5 + $0x138] sm:$0xf]
    %v186 = vld [vmem:[#allocation5 + $0x13c] sm:$0xf]
    %v187 = vld [vmem:[#allocation5 + $0x140] sm:$0xf]
    %v188 = vld [vmem:[#allocation5 + $0x144] sm:$0xf]
    %v189 = vld [vmem:[#allocation5 + $0x148] sm:$0xf]
    %v190 = vld [vmem:[#allocation5 + $0x14c] sm:$0xf]
    %v191 = vld [vmem:[#allocation5 + $0x150] sm:$0xf]
    %v192 = vld [vmem:[#allocation5 + $0x154] sm:$0xf]
    %v193 = vld [vmem:[#allocation5 + $0x158] sm:$0xf]
    %v194 = vld [vmem:[#allocation5 + $0x15c] sm:$0xf]
    %v195 = vld [vmem:[#allocation5 + $0x160] sm:$0xf]
    %v196 = vld [vmem:[#allocation5 + $0x164] sm:$0xf]
    %v197 = vld [vmem:[#allocation5 + $0x168] sm:$0xf]
    %v198 = vld [vmem:[#allocation5 + $0x16c] sm:$0xf]
    %v199 = vld [vmem:[#allocation5 + $0x170] sm:$0xf]
    %v200 = vld [vmem:[#allocation5 + $0x174] sm:$0xf]
    %v201 = vld [vmem:[#allocation5 + $0x178] sm:$0xf]
    %v202 = vld [vmem:[#allocation5 + $0x17c] sm:$0xf]
    %v203 = vld [vmem:[#allocation5 + $0x180] sm:$0xf]
    %v204 = vld [vmem:[#allocation5 + $0x184] sm:$0xf]
    %v205 = vld [vmem:[#allocation5 + $0x188] sm:$0xf]
    %v206 = vld [vmem:[#allocation5 + $0x18c] sm:$0xf]
    %v207 = vld [vmem:[#allocation5 + $0x190] sm:$0xf]
    %v208 = vld [vmem:[#allocation5 + $0x194] sm:$0xf]
    %v209 = vld [vmem:[#allocation5 + $0x198] sm:$0xf]
    %v210 = vld [vmem:[#allocation5 + $0x19c] sm:$0xf]
    %v211 = vld [vmem:[#allocation5 + $0x1a0] sm:$0xf]
    %v212 = vld [vmem:[#allocation5 + $0x1a4] sm:$0xf]
    %v213 = vld [vmem:[#allocation5 + $0x1a8] sm:$0xf]
    %v214 = vld [vmem:[#allocation5 + $0x1ac] sm:$0xf]
    %v215 = vld [vmem:[#allocation5 + $0x1b0] sm:$0xf]
    %v216 = vld [vmem:[#allocation5 + $0x1b4] sm:$0xf]
    %v217 = vld [vmem:[#allocation5 + $0x1b8] sm:$0xf]
    %v218 = vld [vmem:[#allocation5 + $0x1bc] sm:$0xf]
    %v219 = vld [vmem:[#allocation5 + $0x1c0] sm:$0xf]
    %v220 = vld [vmem:[#allocation5 + $0x1c4] sm:$0xf]
    %v221 = vld [vmem:[#allocation5 + $0x1c8] sm:$0xf]
    %v222 = vld [vmem:[#allocation5 + $0x1cc] sm:$0xf]
    %v223 = vld [vmem:[#allocation5 + $0x1d0] sm:$0xf]
    %v224 = vld [vmem:[#allocation5 + $0x1d4] sm:$0xf]
    %v225 = vld [vmem:[#allocation5 + $0x1d8] sm:$0xf]
    %v226 = vld [vmem:[#allocation5 + $0x1dc] sm:$0xf]
    %v227 = vld [vmem:[#allocation5 + $0x1e0] sm:$0xf]
    %v228 = vld [vmem:[#allocation5 + $0x1e4] sm:$0xf]
    %v229 = vld [vmem:[#allocation5 + $0x1e8] sm:$0xf]
    %v230 = vld [vmem:[#allocation5 + $0x1ec] sm:$0xf]
    %v231 = vld [vmem:[#allocation5 + $0x1f0] sm:$0xf]
    %v232 = vld [vmem:[#allocation5 + $0x1f4] sm:$0xf]
    %v233 = vld [vmem:[#allocation5 + $0x1f8] sm:$0xf]
    %v234 = vld [vmem:[#allocation5 + $0x1fc] sm:$0xf]
    %v235 = vld [vmem:[%s2] sm:$0x1]
    %v237 = vlaneseq
    %v238 = vshrl.u32 %v237, 7
    %v239 = vsub.s32 0, %v238
    %v240 = vrot.slane %v235, %v239
    %v370 = vunpack.c.l.b16 %v107
    %v371 = vunpack.c.l.b16 %v108
    %v372 = vunpack.c.l.b16 %v109
    %v373 = vunpack.c.l.b16 %v110
    %v374 = vunpack.c.l.b16 %v111
    %v375 = vunpack.c.l.b16 %v112
    %v376 = vunpack.c.l.b16 %v113
    %v377 = vunpack.c.l.b16 %v114
    %v378 = vunpack.c.l.b16 %v115
    %v379 = vunpack.c.l.b16 %v116
    %v380 = vunpack.c.l.b16 %v117
    %v381 = vunpack.c.l.b16 %v118
    %v382 = vunpack.c.l.b16 %v119
    %v383 = vunpack.c.l.b16 %v120
    %v384 = vunpack.c.l.b16 %v121
    %v385 = vunpack.c.l.b16 %v122
    %v386 = vunpack.c.l.b16 %v123
    %v387 = vunpack.c.l.b16 %v124
    %v388 = vunpack.c.l.b16 %v125
    %v389 = vunpack.c.l.b16 %v126
    %v390 = vunpack.c.l.b16 %v127
    %v391 = vunpack.c.l.b16 %v128
    %v392 = vunpack.c.l.b16 %v129
    %v393 = vunpack.c.l.b16 %v130
    %v394 = vunpack.c.l.b16 %v131
    %v395 = vunpack.c.l.b16 %v132
    %v396 = vunpack.c.l.b16 %v133
    %v397 = vunpack.c.l.b16 %v134
    %v398 = vunpack.c.l.b16 %v135
    %v399 = vunpack.c.l.b16 %v136
    %v400 = vunpack.c.l.b16 %v137
    %v401 = vunpack.c.l.b16 %v138
    %v402 = vunpack.c.l.b16 %v139
    %v403 = vunpack.c.l.b16 %v140
    %v404 = vunpack.c.l.b16 %v141
    %v405 = vunpack.c.l.b16 %v142
    %v406 = vunpack.c.l.b16 %v143
    %v407 = vunpack.c.l.b16 %v144
    %v408 = vunpack.c.l.b16 %v145
    %v409 = vunpack.c.l.b16 %v146
    %v410 = vunpack.c.l.b16 %v147
    %v411 = vunpack.c.l.b16 %v148
    %v412 = vunpack.c.l.b16 %v149
    %v413 = vunpack.c.l.b16 %v150
    %v414 = vunpack.c.l.b16 %v151
    %v415 = vunpack.c.l.b16 %v152
    %v416 = vunpack.c.l.b16 %v153
    %v417 = vunpack.c.l.b16 %v154
    %v418 = vunpack.c.l.b16 %v155
    %v419 = vunpack.c.l.b16 %v156
    %v420 = vunpack.c.l.b16 %v157
    %v421 = vunpack.c.l.b16 %v158
    %v422 = vunpack.c.l.b16 %v159
    %v423 = vunpack.c.l.b16 %v160
    %v424 = vunpack.c.l.b16 %v161
    %v425 = vunpack.c.l.b16 %v162
    %v426 = vunpack.c.l.b16 %v163
    %v427 = vunpack.c.l.b16 %v164
    %v428 = vunpack.c.l.b16 %v165
    %v429 = vunpack.c.l.b16 %v166
    %v430 = vunpack.c.l.b16 %v167
    %v431 = vunpack.c.l.b16 %v168
    %v432 = vunpack.c.l.b16 %v169
    %v433 = vunpack.c.l.b16 %v170
    %v434 = vunpack.c.l.b16 %v171
    %v435 = vunpack.c.l.b16 %v172
    %v436 = vunpack.c.l.b16 %v173
    %v437 = vunpack.c.l.b16 %v174
    %v438 = vunpack.c.l.b16 %v175
    %v439 = vunpack.c.l.b16 %v176
    %v440 = vunpack.c.l.b16 %v177
    %v441 = vunpack.c.l.b16 %v178
    %v442 = vunpack.c.l.b16 %v179
    %v443 = vunpack.c.l.b16 %v180
    %v444 = vunpack.c.l.b16 %v181
    %v445 = vunpack.c.l.b16 %v182
    %v446 = vunpack.c.l.b16 %v183
    %v447 = vunpack.c.l.b16 %v184
    %v448 = vunpack.c.l.b16 %v185
    %v449 = vunpack.c.l.b16 %v186
    %v450 = vunpack.c.l.b16 %v187
    %v451 = vunpack.c.l.b16 %v188
    %v452 = vunpack.c.l.b16 %v189
    %v453 = vunpack.c.l.b16 %v190
    %v454 = vunpack.c.l.b16 %v191
    %v455 = vunpack.c.l.b16 %v192
    %v456 = vunpack.c.l.b16 %v193
    %v457 = vunpack.c.l.b16 %v194
    %v458 = vunpack.c.l.b16 %v195
    %v459 = vunpack.c.l.b16 %v196
    %v460 = vunpack.c.l.b16 %v197
    %v461 = vunpack.c.l.b16 %v198
    %v462 = vunpack.c.l.b16 %v199
    %v463 = vunpack.c.l.b16 %v200
    %v464 = vunpack.c.l.b16 %v201
    %v465 = vunpack.c.l.b16 %v202
    %v466 = vunpack.c.l.b16 %v203
    %v467 = vunpack.c.l.b16 %v204
    %v468 = vunpack.c.l.b16 %v205
    %v469 = vunpack.c.l.b16 %v206
    %v470 = vunpack.c.l.b16 %v207
    %v471 = vunpack.c.l.b16 %v208
    %v472 = vunpack.c.l.b16 %v209
    %v473 = vunpack.c.l.b16 %v210
    %v474 = vunpack.c.l.b16 %v211
    %v475 = vunpack.c.l.b16 %v212
    %v476 = vunpack.c.l.b16 %v213
    %v477 = vunpack.c.l.b16 %v214
    %v478 = vunpack.c.l.b16 %v215
    %v479 = vunpack.c.l.b16 %v216
    %v480 = vunpack.c.l.b16 %v217
    %v481 = vunpack.c.l.b16 %v218
    %v482 = vunpack.c.l.b16 %v219
    %v483 = vunpack.c.l.b16 %v220
    %v484 = vunpack.c.l.b16 %v221
    %v485 = vunpack.c.l.b16 %v222
    %v486 = vunpack.c.l.b16 %v223
    %v487 = vunpack.c.l.b16 %v224
    %v488 = vunpack.c.l.b16 %v225
    %v489 = vunpack.c.l.b16 %v226
    %v490 = vunpack.c.l.b16 %v227
    %v491 = vunpack.c.l.b16 %v228
    %v492 = vunpack.c.l.b16 %v229
    %v493 = vunpack.c.l.b16 %v230
    %v494 = vunpack.c.l.b16 %v231
    %v495 = vunpack.c.l.b16 %v232
    %v496 = vunpack.c.l.b16 %v233
    %v497 = vunpack.c.l.b16 %v234
    %v498 = vpack.c.b16 %v371, %v370
    %v499 = vpack.c.b16 %v373, %v372
    %v500 = vpack.c.b16 %v375, %v374
    %v501 = vpack.c.b16 %v377, %v376
    %v502 = vpack.c.b16 %v379, %v378
    %v503 = vpack.c.b16 %v381, %v380
    %v504 = vpack.c.b16 %v383, %v382
    %v505 = vpack.c.b16 %v385, %v384
    %v506 = vpack.c.b16 %v387, %v386
    %v507 = vpack.c.b16 %v389, %v388
    %v508 = vpack.c.b16 %v391, %v390
    %v509 = vpack.c.b16 %v393, %v392
    %v510 = vpack.c.b16 %v395, %v394
    %v511 = vpack.c.b16 %v397, %v396
    %v512 = vpack.c.b16 %v399, %v398
    %v513 = vpack.c.b16 %v401, %v400
    %v514 = vpack.c.b16 %v403, %v402
    %v515 = vpack.c.b16 %v405, %v404
    %v516 = vpack.c.b16 %v407, %v406
    %v517 = vpack.c.b16 %v409, %v408
    %v518 = vpack.c.b16 %v411, %v410
    %v519 = vpack.c.b16 %v413, %v412
    %v520 = vpack.c.b16 %v415, %v414
    %v521 = vpack.c.b16 %v417, %v416
    %v522 = vpack.c.b16 %v419, %v418
    %v523 = vpack.c.b16 %v421, %v420
    %v524 = vpack.c.b16 %v423, %v422
    %v525 = vpack.c.b16 %v425, %v424
    %v526 = vpack.c.b16 %v427, %v426
    %v527 = vpack.c.b16 %v429, %v428
    %v528 = vpack.c.b16 %v431, %v430
    %v529 = vpack.c.b16 %v433, %v432
    %v530 = vpack.c.b16 %v435, %v434
    %v531 = vpack.c.b16 %v437, %v436
    %v532 = vpack.c.b16 %v439, %v438
    %v533 = vpack.c.b16 %v441, %v440
    %v534 = vpack.c.b16 %v443, %v442
    %v535 = vpack.c.b16 %v445, %v444
    %v536 = vpack.c.b16 %v447, %v446
    %v537 = vpack.c.b16 %v449, %v448
    %v538 = vpack.c.b16 %v451, %v450
    %v539 = vpack.c.b16 %v453, %v452
    %v540 = vpack.c.b16 %v455, %v454
    %v541 = vpack.c.b16 %v457, %v456
    %v542 = vpack.c.b16 %v459, %v458
    %v543 = vpack.c.b16 %v461, %v460
    %v544 = vpack.c.b16 %v463, %v462
    %v545 = vpack.c.b16 %v465, %v464
    %v546 = vpack.c.b16 %v467, %v466
    %v547 = vpack.c.b16 %v469, %v468
    %v548 = vpack.c.b16 %v471, %v470
    %v549 = vpack.c.b16 %v473, %v472
    %v550 = vpack.c.b16 %v475, %v474
    %v551 = vpack.c.b16 %v477, %v476
    %v552 = vpack.c.b16 %v479, %v478
    %v553 = vpack.c.b16 %v481, %v480
    %v554 = vpack.c.b16 %v483, %v482
    %v555 = vpack.c.b16 %v485, %v484
    %v556 = vpack.c.b16 %v487, %v486
    %v557 = vpack.c.b16 %v489, %v488
    %v558 = vpack.c.b16 %v491, %v490
    %v559 = vpack.c.b16 %v493, %v492
    %v560 = vpack.c.b16 %v495, %v494
    %v561 = vpack.c.b16 %v497, %v496
    %626 = vmatprep.subr.bf16.mxu0 0
    %627 = vmatpush1.bf16.msra.mxu0 %v498
    %628 = vmatprep.subr.bf16.mxu0 0
    %629 = vmatpush1.bf16.msra.mxu0 %v499
    %630 = vmatprep.subr.bf16.mxu0 0
    %631 = vmatpush1.bf16.msra.mxu0 %v500
    %632 = vmatprep.subr.bf16.mxu0 0
    %633 = vmatpush1.bf16.msra.mxu0 %v501
    %634 = vmatprep.subr.bf16.mxu0 0
    %635 = vmatpush1.bf16.msra.mxu0 %v502
    %636 = vmatprep.subr.bf16.mxu0 0
    %637 = vmatpush1.bf16.msra.mxu0 %v503
    %638 = vmatprep.subr.bf16.mxu0 0
    %639 = vmatpush1.bf16.msra.mxu0 %v504
    %640 = vmatprep.subr.bf16.mxu0 0
    %641 = vmatpush1.bf16.msra.mxu0 %v505
    %642 = vmatprep.subr.bf16.mxu0 0
    %643 = vmatpush1.bf16.msra.mxu0 %v506
    %644 = vmatprep.subr.bf16.mxu0 0
    %645 = vmatpush1.bf16.msra.mxu0 %v507
    %646 = vmatprep.subr.bf16.mxu0 0
    %647 = vmatpush1.bf16.msra.mxu0 %v508
    %648 = vmatprep.subr.bf16.mxu0 0
    %649 = vmatpush1.bf16.msra.mxu0 %v509
    %650 = vmatprep.subr.bf16.mxu0 0
    %651 = vmatpush1.bf16.msra.mxu0 %v510
    %652 = vmatprep.subr.bf16.mxu0 0
    %653 = vmatpush1.bf16.msra.mxu0 %v511
    %654 = vmatprep.subr.bf16.mxu0 0
    %655 = vmatpush1.bf16.msra.mxu0 %v512
    %656 = vmatprep.subr.bf16.mxu0 0
    %657 = vmatpush1.bf16.msra.mxu0 %v513
    %658 = vmatprep.mubr.bf16.mxu0 %v100
    %659 = vmatmul.mubr.bf16.gmra.mrb[0].mxu0 %v99
    %v660 = vpop.f32.mrb[0].mxu0
    %v661 = vadd.f32 %v240, %v660
    %v662 = vpop.f32.mrb[0].mxu0
    %v663 = vpop.f32.mrb[0].mxu0
    %v664 = vadd.f32 %v240, %v663
    %v665 = vpop.f32.mrb[0].mxu0
    %666 = vdwg.mxu0
    %667 = vmatprep.subr.bf16.mxu0 0
    %668 = vmatpush1.bf16.msra.mxu0 %v514
    %669 = vmatprep.subr.bf16.mxu0 0
    %670 = vmatpush1.bf16.msra.mxu0 %v515
    %671 = vmatprep.subr.bf16.mxu0 0
    %672 = vmatpush1.bf16.msra.mxu0 %v516
    %673 = vmatprep.subr.bf16.mxu0 0
    %674 = vmatpush1.bf16.msra.mxu0 %v517
    %675 = vmatprep.subr.bf16.mxu0 0
    %676 = vmatpush1.bf16.msra.mxu0 %v518
    %677 = vmatprep.subr.bf16.mxu0 0
    %678 = vmatpush1.bf16.msra.mxu0 %v519
    %679 = vmatprep.subr.bf16.mxu0 0
    %680 = vmatpush1.bf16.msra.mxu0 %v520
    %681 = vmatprep.subr.bf16.mxu0 0
    %682 = vmatpush1.bf16.msra.mxu0 %v521
    %683 = vmatprep.subr.bf16.mxu0 0
    %684 = vmatpush1.bf16.msra.mxu0 %v522
    %685 = vmatprep.subr.bf16.mxu0 0
    %686 = vmatpush1.bf16.msra.mxu0 %v523
    %687 = vmatprep.subr.bf16.mxu0 0
    %688 = vmatpush1.bf16.msra.mxu0 %v524
    %689 = vmatprep.subr.bf16.mxu0 0
    %690 = vmatpush1.bf16.msra.mxu0 %v525
    %691 = vmatprep.subr.bf16.mxu0 0
    %692 = vmatpush1.bf16.msra.mxu0 %v526
    %693 = vmatprep.subr.bf16.mxu0 0
    %694 = vmatpush1.bf16.msra.mxu0 %v527
    %695 = vmatprep.subr.bf16.mxu0 0
    %696 = vmatpush1.bf16.msra.mxu0 %v528
    %697 = vmatprep.subr.bf16.mxu0 0
    %698 = vmatpush1.bf16.msra.mxu0 %v529
    %699 = vmatprep.mubr.bf16.mxu0 %v102
    %700 = vmatmul.mubr.bf16.gmra.mrb[0].mxu0 %v101
    %v701 = vpop.f32.mrb[0].mxu0
    %v702 = vadd.f32 %v661, %v701
    %v703 = vpop.f32.mrb[0].mxu0
    %v704 = vpop.f32.mrb[0].mxu0
    %v705 = vadd.f32 %v664, %v704
    %v706 = vpop.f32.mrb[0].mxu0
    %707 = vdwg.mxu0
    %708 = vmatprep.subr.bf16.mxu0 0
    %709 = vmatpush1.bf16.msra.mxu0 %v530
    %710 = vmatprep.subr.bf16.mxu0 0
    %711 = vmatpush1.bf16.msra.mxu0 %v531
    %712 = vmatprep.subr.bf16.mxu0 0
    %713 = vmatpush1.bf16.msra.mxu0 %v532
    %714 = vmatprep.subr.bf16.mxu0 0
    %715 = vmatpush1.bf16.msra.mxu0 %v533
    %716 = vmatprep.subr.bf16.mxu0 0
    %717 = vmatpush1.bf16.msra.mxu0 %v534
    %718 = vmatprep.subr.bf16.mxu0 0
    %719 = vmatpush1.bf16.msra.mxu0 %v535
    %720 = vmatprep.subr.bf16.mxu0 0
    %721 = vmatpush1.bf16.msra.mxu0 %v536
    %722 = vmatprep.subr.bf16.mxu0 0
    %723 = vmatpush1.bf16.msra.mxu0 %v537
    %724 = vmatprep.subr.bf16.mxu0 0
    %725 = vmatpush1.bf16.msra.mxu0 %v538
    %726 = vmatprep.subr.bf16.mxu0 0
    %727 = vmatpush1.bf16.msra.mxu0 %v539
    %728 = vmatprep.subr.bf16.mxu0 0
    %729 = vmatpush1.bf16.msra.mxu0 %v540
    %730 = vmatprep.subr.bf16.mxu0 0
    %731 = vmatpush1.bf16.msra.mxu0 %v541
    %732 = vmatprep.subr.bf16.mxu0 0
    %733 = vmatpush1.bf16.msra.mxu0 %v542
    %734 = vmatprep.subr.bf16.mxu0 0
    %735 = vmatpush1.bf16.msra.mxu0 %v543
    %736 = vmatprep.subr.bf16.mxu0 0
    %737 = vmatpush1.bf16.msra.mxu0 %v544
    %738 = vmatprep.subr.bf16.mxu0 0
    %739 = vmatpush1.bf16.msra.mxu0 %v545
    %740 = vmatprep.mubr.bf16.mxu0 %v104
    %741 = vmatmul.mubr.bf16.gmra.mrb[0].mxu0 %v103
    %v742 = vpop.f32.mrb[0].mxu0
    %v743 = vadd.f32 %v702, %v742
    %v744 = vpop.f32.mrb[0].mxu0
    %v745 = vpop.f32.mrb[0].mxu0
    %v746 = vadd.f32 %v705, %v745
    %v747 = vpop.f32.mrb[0].mxu0
    %748 = vdwg.mxu0
    %749 = vmatprep.subr.bf16.mxu0 0
    %750 = vmatpush1.bf16.msra.mxu0 %v546
    %751 = vmatprep.subr.bf16.mxu0 0
    %752 = vmatpush1.bf16.msra.mxu0 %v547
    %753 = vmatprep.subr.bf16.mxu0 0
    %754 = vmatpush1.bf16.msra.mxu0 %v548
    %755 = vmatprep.subr.bf16.mxu0 0
    %756 = vmatpush1.bf16.msra.mxu0 %v549
    %757 = vmatprep.subr.bf16.mxu0 0
    %758 = vmatpush1.bf16.msra.mxu0 %v550
    %759 = vmatprep.subr.bf16.mxu0 0
    %760 = vmatpush1.bf16.msra.mxu0 %v551
    %761 = vmatprep.subr.bf16.mxu0 0
    %762 = vmatpush1.bf16.msra.mxu0 %v552
    %763 = vmatprep.subr.bf16.mxu0 0
    %764 = vmatpush1.bf16.msra.mxu0 %v553
    %765 = vmatprep.subr.bf16.mxu0 0
    %766 = vmatpush1.bf16.msra.mxu0 %v554
    %767 = vmatprep.subr.bf16.mxu0 0
    %768 = vmatpush1.bf16.msra.mxu0 %v555
    %769 = vmatprep.subr.bf16.mxu0 0
    %770 = vmatpush1.bf16.msra.mxu0 %v556
    %771 = vmatprep.subr.bf16.mxu0 0
    %772 = vmatpush1.bf16.msra.mxu0 %v557
    %773 = vmatprep.subr.bf16.mxu0 0
    %774 = vmatpush1.bf16.msra.mxu0 %v558
    %775 = vmatprep.subr.bf16.mxu0 0
    %776 = vmatpush1.bf16.msra.mxu0 %v559
    %777 = vmatprep.subr.bf16.mxu0 0
    %778 = vmatpush1.bf16.msra.mxu0 %v560
    %779 = vmatprep.subr.bf16.mxu0 0
    %780 = vmatpush1.bf16.msra.mxu0 %v561
    %781 = vmatprep.mubr.bf16.mxu0 %v106
    %782 = vmatmul.mubr.bf16.gmra.mrb[0].mxu0 %v105
    %v783 = vpop.f32.mrb[0].mxu0
    %v784 = vadd.f32 %v743, %v783
    %v785 = vpop.f32.mrb[0].mxu0
    %v786 = vpop.f32.mrb[0].mxu0
    %v787 = vadd.f32 %v746, %v786
    %v788 = vpop.f32.mrb[0].mxu0
    %789 = vdwg.mxu0
    %v790 = vmax.f32 %v784, 0.0
    %v791 = vmax.f32 %v787, 0.0
    %v792 = vpack.c.bf16 %v791, %v790
    %v793 = vld [vmem:[#allocation7] sm:$0xf]
    %v794 = vld [vmem:[#allocation7 + $0x4] sm:$0xf]
    %v795 = vld [vmem:[#allocation7 + $0x8] sm:$0xf]
    %v796 = vld [vmem:[#allocation7 + $0xc] sm:$0xf]
    %v797 = vld [vmem:[#allocation7 + $0x10] sm:$0xf]
    %v798 = vld [vmem:[#allocation7 + $0x14] sm:$0xf]
    %v799 = vld [vmem:[#allocation7 + $0x18] sm:$0xf]
    %v800 = vld [vmem:[#allocation7 + $0x1c] sm:$0xf]
    %v801 = vld [vmem:[#allocation7 + $0x20] sm:$0xf]
    %v802 = vld [vmem:[#allocation7 + $0x24] sm:$0xf]
    %v803 = vld [vmem:[#allocation7 + $0x28] sm:$0xf]
    %v804 = vld [vmem:[#allocation7 + $0x2c] sm:$0xf]
    %v805 = vld [vmem:[#allocation7 + $0x30] sm:$0xf]
    %v806 = vld [vmem:[#allocation7 + $0x34] sm:$0xf]
    %v807 = vld [vmem:[#allocation7 + $0x38] sm:$0xf]
    %v808 = vld [vmem:[#allocation7 + $0x3c] sm:$0xf]
    %v809 = vld [vmem:[%s4] sm:$0x1]
    %v811 = vlaneseq
    %v812 = vshrl.u32 %v811, 7
    %v813 = vsub.s32 0, %v812
    %v814 = vrot.slane %v809, %v813
    %v832 = vunpack.c.l.b16 %v793
    %v833 = vunpack.c.l.b16 %v794
    %v834 = vunpack.c.l.b16 %v795
    %v835 = vunpack.c.l.b16 %v796
    %v836 = vunpack.c.l.b16 %v797
    %v837 = vunpack.c.l.b16 %v798
    %v838 = vunpack.c.l.b16 %v799
    %v839 = vunpack.c.l.b16 %v800
    %v840 = vunpack.c.l.b16 %v801
    %v841 = vunpack.c.l.b16 %v802
    %v842 = vunpack.c.l.b16 %v803
    %v843 = vunpack.c.l.b16 %v804
    %v844 = vunpack.c.l.b16 %v805
    %v845 = vunpack.c.l.b16 %v806
    %v846 = vunpack.c.l.b16 %v807
    %v847 = vunpack.c.l.b16 %v808
    %v848 = vpack.c.b16 %v833, %v832
    %v849 = vpack.c.b16 %v835, %v834
    %v850 = vpack.c.b16 %v837, %v836
    %v851 = vpack.c.b16 %v839, %v838
    %v852 = vpack.c.b16 %v841, %v840
    %v853 = vpack.c.b16 %v843, %v842
    %v854 = vpack.c.b16 %v845, %v844
    %v855 = vpack.c.b16 %v847, %v846
    %864 = vmatprep.subr.bf16.mxu0 0
    %865 = vmatpush1.bf16.msra.mxu0 %v848
    %866 = vmatprep.subr.bf16.mxu0 0
    %867 = vmatpush1.bf16.msra.mxu0 %v849
    %868 = vmatprep.subr.bf16.mxu0 0
    %869 = vmatpush1.bf16.msra.mxu0 %v850
    %870 = vmatprep.subr.bf16.mxu0 0
    %871 = vmatpush1.bf16.msra.mxu0 %v851
    %872 = vmatprep.subr.bf16.mxu0 0
    %873 = vmatpush1.bf16.msra.mxu0 %v852
    %874 = vmatprep.subr.bf16.mxu0 0
    %875 = vmatpush1.bf16.msra.mxu0 %v853
    %876 = vmatprep.subr.bf16.mxu0 0
    %877 = vmatpush1.bf16.msra.mxu0 %v854
    %878 = vmatprep.subr.bf16.mxu0 0
    %879 = vmatpush1.bf16.msra.mxu0 %v855
    %880 = vmatprep.subr.bf16.mxu0 0
    %881 = vmatpush1.bf16.msra.mxu0 0
    %882 = vmatprep.subr.bf16.mxu0 0
    %883 = vmatpush1.bf16.msra.mxu0 0
    %884 = vmatprep.subr.bf16.mxu0 0
    %885 = vmatpush1.bf16.msra.mxu0 0
    %886 = vmatprep.subr.bf16.mxu0 0
    %887 = vmatpush1.bf16.msra.mxu0 0
    %888 = vmatprep.subr.bf16.mxu0 0
    %889 = vmatpush1.bf16.msra.mxu0 0
    %890 = vmatprep.subr.bf16.mxu0 0
    %891 = vmatpush1.bf16.msra.mxu0 0
    %892 = vmatprep.subr.bf16.mxu0 0
    %893 = vmatpush1.bf16.msra.mxu0 0
    %894 = vmatprep.subr.bf16.mxu0 0
    %895 = vmatpush1.bf16.msra.mxu0 0
    %896 = vmatprep.mubr.bf16.mxu0 0
    %897 = vmatmul.mubr.bf16.gmra.mrb[0].mxu0 %v792
    %v898 = vpop.f32.mrb[0].mxu0
    %v899 = vadd.f32 %v814, %v898
    %v900 = vpop.f32.mrb[0].mxu0
    %v901 = vpop.f32.mrb[0].mxu0
    %v902 = vadd.f32 %v814, %v901
    %v903 = vpop.f32.mrb[0].mxu0
    %904 = vdwg.mxu0
    %v905 = vmax.f32 %v899, 0.0
    %v906 = vmax.f32 %v902, 0.0
    %v907 = vpack.c.bf16 %v906, %v905
    %v908 = vld [vmem:[#allocation8] sm:$0xf]
    %v909 = vld [vmem:[#allocation8 + $0x4] sm:$0xf]
    %v910 = vld [vmem:[#allocation8 + $0x8] sm:$0xf]
    %v911 = vld [vmem:[#allocation8 + $0xc] sm:$0xf]
    %v912 = vld [vmem:[#allocation8 + $0x10] sm:$0xf]
    %v913 = vld [vmem:[#allocation8 + $0x14] sm:$0xf]
    %v914 = vld [vmem:[#allocation8 + $0x18] sm:$0xf]
    %v915 = vld [vmem:[#allocation8 + $0x1c] sm:$0xf]
    %v916 = vld [vmem:[#allocation8 + $0x20] sm:$0xf]
    %v917 = vld [vmem:[#allocation8 + $0x24] sm:$0xf]
    %v918 = vld [vmem:[#allocation8 + $0x28] sm:$0xf]
    %v919 = vld [vmem:[#allocation8 + $0x2c] sm:$0xf]
    %v920 = vld [vmem:[#allocation8 + $0x30] sm:$0xf]
    %v921 = vld [vmem:[#allocation8 + $0x34] sm:$0xf]
    %v922 = vld [vmem:[#allocation8 + $0x38] sm:$0xf]
    %v923 = vld [vmem:[#allocation8 + $0x3c] sm:$0xf]
    %v924 = vld [vmem:[%s6] sm:$0x1]
    %v926 = vlaneseq
    %v927 = vshrl.u32 %v926, 7
    %v928 = vsub.s32 0, %v927
    %v929 = vrot.slane %v924, %v928
    %v947 = vunpack.c.l.b16 %v908
    %v948 = vunpack.c.l.b16 %v909
    %v949 = vunpack.c.l.b16 %v910
    %v950 = vunpack.c.l.b16 %v911
    %v951 = vunpack.c.l.b16 %v912
    %v952 = vunpack.c.l.b16 %v913
    %v953 = vunpack.c.l.b16 %v914
    %v954 = vunpack.c.l.b16 %v915
    %v955 = vunpack.c.l.b16 %v916
    %v956 = vunpack.c.l.b16 %v917
    %v957 = vunpack.c.l.b16 %v918
    %v958 = vunpack.c.l.b16 %v919
    %v959 = vunpack.c.l.b16 %v920
    %v960 = vunpack.c.l.b16 %v921
    %v961 = vunpack.c.l.b16 %v922
    %v962 = vunpack.c.l.b16 %v923
    %v963 = vpack.c.b16 %v948, %v947
    %v964 = vpack.c.b16 %v950, %v949
    %v965 = vpack.c.b16 %v952, %v951
    %v966 = vpack.c.b16 %v954, %v953
    %v967 = vpack.c.b16 %v956, %v955
    %v968 = vpack.c.b16 %v958, %v957
    %v969 = vpack.c.b16 %v960, %v959
    %v970 = vpack.c.b16 %v962, %v961
    %979 = vmatprep.subr.bf16.mxu0 0
    %980 = vmatpush1.bf16.msra.mxu0 %v963
    %981 = vmatprep.subr.bf16.mxu0 0
    %982 = vmatpush1.bf16.msra.mxu0 %v964
    %983 = vmatprep.subr.bf16.mxu0 0
    %984 = vmatpush1.bf16.msra.mxu0 %v965
    %985 = vmatprep.subr.bf16.mxu0 0
    %986 = vmatpush1.bf16.msra.mxu0 %v966
    %987 = vmatprep.subr.bf16.mxu0 0
    %988 = vmatpush1.bf16.msra.mxu0 %v967
    %989 = vmatprep.subr.bf16.mxu0 0
    %990 = vmatpush1.bf16.msra.mxu0 %v968
    %991 = vmatprep.subr.bf16.mxu0 0
    %992 = vmatpush1.bf16.msra.mxu0 %v969
    %993 = vmatprep.subr.bf16.mxu0 0
    %994 = vmatpush1.bf16.msra.mxu0 %v970
    %995 = vmatprep.subr.bf16.mxu0 0
    %996 = vmatpush1.bf16.msra.mxu0 0
    %997 = vmatprep.subr.bf16.mxu0 0
    %998 = vmatpush1.bf16.msra.mxu0 0
    %999 = vmatprep.subr.bf16.mxu0 0
    %1000 = vmatpush1.bf16.msra.mxu0 0
    %1001 = vmatprep.subr.bf16.mxu0 0
    %1002 = vmatpush1.bf16.msra.mxu0 0
    %1003 = vmatprep.subr.bf16.mxu0 0
    %1004 = vmatpush1.bf16.msra.mxu0 0
    %1005 = vmatprep.subr.bf16.mxu0 0
    %1006 = vmatpush1.bf16.msra.mxu0 0
    %1007 = vmatprep.subr.bf16.mxu0 0
    %1008 = vmatpush1.bf16.msra.mxu0 0
    %1009 = vmatprep.subr.bf16.mxu0 0
    %1010 = vmatpush1.bf16.msra.mxu0 0
    %1011 = vmatprep.mubr.bf16.mxu0 0
    %1012 = vmatmul.mubr.bf16.gmra.mrb[0].mxu0 %v907
    %v1013 = vpop.f32.mrb[0].mxu0
    %v1014 = vadd.f32 %v929, %v1013
    %v1015 = vpop.f32.mrb[0].mxu0
    %v1016 = vpop.f32.mrb[0].mxu0
    %v1017 = vadd.f32 %v929, %v1016
    %v1018 = vpop.f32.mrb[0].mxu0
    %1019 = vdwg.mxu0
    %v1020 = vlaneseq
    %v1021 = vand.u32 %v1020, 127
    %vm1022 = vcmp.lt.s32.totalorder %v1021, 10
    %v1023 = vsel %vm1022, %v1014, -inf
    %v1024 = vsel %vm1022, %v1017, -inf
    %1025 = vmax.xlane.f32.xlu0 %v1023
    %v1026 = vpop.xlane.xlu0 %1025
    %1027 = vmax.xlane.f32.xlu0 %v1024
    %v1028 = vpop.xlane.xlu0 %1027
    %v1029 = vsub.f32 %v1023, %v1026
    %v1030 = vsub.f32 %v1024, %v1028
    %v1031 = vmul.f32 %v1029, 1.442695
    %v1032 = vpow.pop %v1031
    %v1033 = vmul.f32 %v1030, 1.442695
    %v1034 = vpow.pop %v1033
    %1035 = vadd.xlane.f32.xlu0 %v1032
    %v1036 = vpop.xlane.xlu0 %1035
    %1037 = vadd.xlane.f32.xlu0 %v1034
    %v1038 = vpop.xlane.xlu0 %1037
    %v1039 = vlog2.pop %v1036
    %v1040 = vmul.f32 %v1039, 0.6931472
    %v1041 = vlog2.pop %v1038
    %v1042 = vmul.f32 %v1041, 0.6931472
    %v1043 = vadd.f32 %v1026, %v1040
    %v1044 = vadd.f32 %v1028, %v1042
    %v1045 = vsub.f32 %v1023, %v1043
    %v1046 = vsub.f32 %v1024, %v1044
    %1047 = vst [vmem:[#allocation10] sm:$0xff] %v1045
    %1048 = vst [vmem:[#allocation10 + $0x8] sm:$0xff] %v1046
    // Predicated region
    $region46: #{tpu_custom_call.1} parent=1 // pred_check
      _
    $region47: #{tpu_custom_call.1} parent=1 // pred_check_branch
      %1050 = sbr.rel (0) target = $region49
    $region48: #{tpu_custom_call.1} parent=1 // pred_region
      %s1052 = ssub.s32 256, 256
      %1053 = vsyncadd [#allocation4], %s1052
      %s1054 = sshll.u32 [#allocation10], 4
      %s1055 = int_to_ptr.vmem [resolvable:$true] %s1054
      %1060 = dma.vmem_to_hbm [thread:$0]  %s1055, 256, %s7, [#allocation4], 128, 128, 8
    $region49: #{tpu_custom_call.1} parent=1 // pred_fallthru
      _
    // Predicated region
    $region50: #{tpu_custom_call.1} parent=1 // pred_check
      _
    $region51: #{tpu_custom_call.1} parent=1 // pred_check_branch
      %1062 = sbr.rel (0) target = $region53
    $region52: #{tpu_custom_call.1} parent=1 // pred_region
      %1063 = dma.done [#allocation4], 256
    $region53: #{tpu_custom_call.1} parent=1 // pred_fallthru
      _
    %1064 = vsyncpa [#allocation3], 1
    %1065 = vsyncpa [#allocation6], 1
    %1066 = vsyncpa [#allocation9], 1
    %1067 = vsyncpa [#allocation4], 1

</llo_original>
